<compile_context>
chip_gen: v6e
topology: v6e:2x2x1
jax: 0.10.0
libtpu: 0.0.40
codegen_flags: <defaults>
</compile_context>

<pallas_src>
import functools

import jax
import jax.numpy as jnp
from jax import lax
from jax.experimental import pallas as pl
from jax.experimental.pallas import tpu as pltpu

# f32 keeps bit-accuracy vs the f32 reference on all generations; flip to jnp.bfloat16 on
# v6e/v7x for shorter MXU pushes and halved weight bytes.
MXU_DTYPE = jnp.float32


# ----------------------------------------------------------------------------
# Fused DecoderLayer kernel (single program; 2 input slabs, 1 output slab)
# ----------------------------------------------------------------------------
def _decoder_layer_kernel(act_ref, prm_ref, out_ref, *,
                          B, Tq, Tk, D, Dk, H, dk, dv, Dff):
    TB = Tq * B           # decoder rows, time-major (row = t*B + b)
    BT = B * Tk           # encoder rows, batch-major (row = b*Tk + k)
    md = MXU_DTYPE

    # ------------------------- unpack activation slab -----------------------
    a = 0
    x_tm = act_ref[a:a + TB, :D];   a += TB        # dec_input, time-major  (TB, D)
    enc = act_ref[a:a + BT, :Dk];   a += BT        # enc_output             (BT, Dk)
    encT = act_ref[a:a + Dk, :BT];  a += Dk        # enc_output^T           (Dk, BT)
    h = act_ref[a:a + B, :D];       a += B         # h0                     (B, D)
    c = act_ref[a:a + B, :D];       a += B         # c0                     (B, D)
    bias = act_ref[a:a + TB, :BT];  a += TB        # additive attn bias     (TB, BT)

    # --------------------------- unpack param slab ---------------------------
    p = 0
    wih = prm_ref[p:p + D, :4 * D];      p += D        # (D, 4D)
    whh = prm_ref[p:p + D, :4 * D];      p += D        # (D, 4D)
    bg = prm_ref[p:p + 1, :4 * D];       p += 1        # b_ih + b_hh  (1, 4D)
    wq = prm_ref[p:p + D, :H * dk];      p += D        # 1/sqrt(dk) folded in
    wkT = prm_ref[p:p + H * dk, :Dk];    p += H * dk
    wv = prm_ref[p:p + Dk, :H * dv];     p += Dk
    wo = prm_ref[p:p + H * dv, :D];      p += H * dv
    ln1g = prm_ref[p:p + 1, :D];         p += 1
    ln1b = prm_ref[p:p + 1, :D];         p += 1
    w1 = prm_ref[p:p + D, :Dff];         p += D
    b1 = prm_ref[p:p + 1, :Dff];         p += 1
    w2 = prm_ref[p:p + Dff, :D];         p += Dff
    b2 = prm_ref[p:p + 1, :D];           p += 1
    ln2g = prm_ref[p:p + 1, :D];         p += 1
    ln2b = prm_ref[p:p + 1, :D];         p += 1

    # --------------------------------- LSTM ----------------------------------
    # Hoisted input projection (one push), then a B-batched recurrence: Tq serial pushes.
    gx = jnp.dot(x_tm.astype(md), wih.astype(md),
                 preferred_element_type=jnp.float32) + bg            # (TB, 4D)
    whh_c = whh.astype(md)
    hs = []
    for t in range(Tq):                                              # static unroll
        g = gx[t * B:(t + 1) * B, :] + jnp.dot(h.astype(md), whh_c,
                                               preferred_element_type=jnp.float32)
        # PyTorch gate order: input, forget, cell(g), output.
        i_g = jax.nn.sigmoid(g[:, 0 * D:1 * D])
        f_g = jax.nn.sigmoid(g[:, 1 * D:2 * D])
        g_g = jnp.tanh(g[:, 2 * D:3 * D])
        o_g = jax.nn.sigmoid(g[:, 3 * D:4 * D])
        c = f_g * c + i_g * g_g
        h = o_g * jnp.tanh(c)
        hs.append(h)                                                 # stays in vregs
    lstm = jnp.concatenate(hs, axis=0)                               # (TB, D), time-major

    # ----------------------- cross multi-head attention ----------------------
    lstm_c = lstm.astype(md)
    q_all = jnp.dot(lstm_c, wq.astype(md),
                    preferred_element_type=jnp.float32)              # (TB, H*dk)
    kT_all = jnp.dot(wkT.astype(md), encT.astype(md),
                     preferred_element_type=jnp.float32)             # (H*dk, BT)
    v_all = jnp.dot(enc.astype(md), wv.astype(md),
                    preferred_element_type=jnp.float32)              # (BT, H*dv)

    ctxs, attns = [], []
    for hh in range(H):                                              # H = 2
        s = jnp.dot(q_all[:, hh * dk:(hh + 1) * dk].astype(md),
                    kT_all[hh * dk:(hh + 1) * dk, :].astype(md),
                    preferred_element_type=jnp.float32) + bias       # (TB, BT)
        m = jnp.max(s, axis=-1, keepdims=True)
        e = jnp.exp(s - m)                                           # cross-batch cols -> 0
        a_h = e * pl.reciprocal(jnp.sum(e, axis=-1, keepdims=True), approx=True)
        attns.append(a_h)
        ctxs.append(jnp.dot(a_h.astype(md),
                            v_all[:, hh * dv:(hh + 1) * dv].astype(md),
                            preferred_element_type=jnp.float32))     # (TB, dv)
    ctx = jnp.concatenate(ctxs, axis=-1)                             # (TB, H*dv)
    xo = lstm + jnp.dot(ctx.astype(md), wo.astype(md),
                        preferred_element_type=jnp.float32)          # +residual

    # LayerNorm(eps = 1e-6)
    mu = jnp.mean(xo, axis=-1, keepdims=True)
    var = jnp.mean((xo - mu) * (xo - mu), axis=-1, keepdims=True)
    xo = (xo - mu) * lax.rsqrt(var + 1e-6) * ln1g + ln1b

    # ------------------------ position-wise feed-forward ---------------------
    hid = jnp.maximum(
        jnp.dot(xo.astype(md), w1.astype(md), preferred_element_type=jnp.float32) + b1, 0.0)
    y = jnp.dot(hid.astype(md), w2.astype(md),
                preferred_element_type=jnp.float32) + b2 + xo
    mu2 = jnp.mean(y, axis=-1, keepdims=True)
    var2 = jnp.mean((y - mu2) * (y - mu2), axis=-1, keepdims=True)
    y = (y - mu2) * lax.rsqrt(var2 + 1e-6) * ln2g + ln2b

    # --------------------------- single packed store -------------------------
    OL = out_ref.shape[1]

    def padw(arr):
        w = arr.shape[1]
        if w < OL:
            arr = jnp.concatenate(
                [arr, jnp.zeros((arr.shape[0], OL - w), jnp.float32)], axis=-1)
        return arr

    out_ref[...] = jnp.concatenate(
        [padw(y), padw(h), padw(c)] + [padw(a_h) for a_h in attns], axis=0)


# ----------------------------------------------------------------------------
# Wrapper: slab packing (free XLA ops, fused under jit) + single pallas_call
# ----------------------------------------------------------------------------
def _pad_lane(arr, lane):
    arr = arr.astype(jnp.float32)
    if arr.shape[-1] < lane:
        arr = jnp.pad(arr, ((0, 0), (0, lane - arr.shape[-1])))
    return arr


@functools.partial(jax.jit, static_argnames=("n_head", "d_k", "d_v", "index"))
def decoder_layer_forward(params, dec_input, enc_output, *, n_head, d_k, d_v,
                          index=0, hidden=None, dec_enc_attn_mask=None):
    """dec_input (B,Tq,Dq), enc_output (B,Tk,Dk); hidden=((1,B,Dq),(1,B,Dq)) used when
    index != 0; dec_enc_attn_mask (B,Tq,Tk) or (B,1,Tk), 0 = masked.
    Returns (dec_output (B,Tq,Dq), dec_enc_attn (B,H,Tq,Tk), (h, c) each (1,B,Dq))."""
    B, Tq, Dq = dec_input.shape
    _, Tk, Dk = enc_output.shape
    H = n_head
    Dff = params["w1"].shape[1]
    TB, BT = Tq * B, B * Tk

    if index == 0 or hidden is None:                    # init_hidden semantics
        h0 = jnp.zeros((B, Dq), jnp.float32)
        c0 = jnp.zeros((B, Dq), jnp.float32)
    else:
        h0 = hidden[0].reshape(B, Dq).astype(jnp.float32)
        c0 = hidden[1].reshape(B, Dq).astype(jnp.float32)

    # Additive attention bias: 0 where (same batch AND user-kept), -1e9 elsewhere.
    # Rows are time-major decoder positions (t*B+b); cols are batch-major keys (b'*Tk+k).
    if dec_enc_attn_mask is None:
        user_keep = jnp.ones((B, Tq, Tk), jnp.float32)
    else:
        user_keep = jnp.broadcast_to(
            dec_enc_attn_mask.reshape(B, -1, Tk), (B, Tq, Tk)).astype(jnp.float32)
    keep = (jnp.transpose(user_keep, (1, 0, 2))[:, :, None, :]
            * jnp.eye(B, dtype=jnp.float32)[None, :, :, None])        # (Tq,B,B,Tk)
    bias = ((keep - 1.0) * 1e9).reshape(TB, BT)

    x_tm = jnp.transpose(dec_input, (1, 0, 2)).reshape(TB, Dq)        # time-major
    enc = enc_output.reshape(BT, Dk)
    encT = enc.T                                                      # (Dk, BT), free in XLA

    # ---- activation slab (1 DMA) ----
    ALANE = max(Dq, Dk, BT)
    act = jnp.concatenate([
        _pad_lane(x_tm, ALANE), _pad_lane(enc, ALANE), _pad_lane(encT, ALANE),
        _pad_lane(h0, ALANE), _pad_lane(c0, ALANE), _pad_lane(bias, ALANE)], axis=0)

    # ---- parameter slab (1 DMA): LSTM weights transposed, biases summed, 1/sqrt(d_k)
    # folded into Wq, Wk pre-transposed so K^T needs no in-kernel transpose.
    scale = 1.0 / (float(d_k) ** 0.5)
    PLANE = max(4 * Dq, Dff, Dk, H * d_k, H * d_v, Dq)
    prm = jnp.concatenate([
        _pad_lane(params["w_ih"].T, PLANE),
        _pad_lane(params["w_hh"].T, PLANE),
        _pad_lane((params["b_ih"] + params["b_hh"]).reshape(1, -1), PLANE),
        _pad_lane(params["wq"] * scale, PLANE),
        _pad_lane(params["wk"].T, PLANE),
        _pad_lane(params["wv"], PLANE),
        _pad_lane(params["wo"], PLANE),
        _pad_lane(params["ln1_g"].reshape(1, -1), PLANE),
        _pad_lane(params["ln1_b"].reshape(1, -1), PLANE),
        _pad_lane(params["w1"], PLANE),
        _pad_lane(params["b1"].reshape(1, -1), PLANE),
        _pad_lane(params["w2"], PLANE),
        _pad_lane(params["b2"].reshape(1, -1), PLANE),
        _pad_lane(params["ln2_g"].reshape(1, -1), PLANE),
        _pad_lane(params["ln2_b"].reshape(1, -1), PLANE)], axis=0)

    OLANE = max(Dq, BT)
    out_rows = TB + 2 * B + H * TB

    kernel = functools.partial(_decoder_layer_kernel, B=B, Tq=Tq, Tk=Tk, D=Dq,
                               Dk=Dk, H=H, dk=d_k, dv=d_v, Dff=Dff)
    vmem = pl.BlockSpec(memory_space=pltpu.MemorySpace.VMEM)
    out = pl.pallas_call(
        kernel,
        out_shape=jax.ShapeDtypeStruct((out_rows, OLANE), jnp.float32),
        in_specs=[vmem, vmem],
        out_specs=vmem,
    )(act, prm)

    # ---- unpack the single output slab (free XLA slices/reshapes) ----
    y = out[:TB, :Dq].reshape(Tq, B, Dq).transpose(1, 0, 2)           # (B, Tq, Dq)
    hT = out[TB:TB + B, :Dq]
    cT = out[TB + B:TB + 2 * B, :Dq]
    attn_raw = out[TB + 2 * B:, :BT].reshape(H, Tq, B, B, Tk)
    idx = jnp.arange(B)
    attn = jnp.transpose(attn_raw[:, :, idx, idx, :], (2, 0, 1, 3))   # (B, H, Tq, Tk)
    return y, attn, (hT[None], cT[None])


# ----------------------------------------------------------------------------
# Pure-JAX reference (for correctness checks)
# ----------------------------------------------------------------------------
def reference_forward(params, dec_input, enc_output, n_head, d_k, d_v,
                      h0=None, c0=None, mask=None):
    B, T, D = dec_input.shape
    if h0 is None:
        h0 = jnp.zeros((B, D), jnp.float32)
    if c0 is None:
        c0 = jnp.zeros((B, D), jnp.float32)

    def cell(carry, x_t):
        h, c = carry
        gates = (x_t @ params["w_ih"].T + params["b_ih"]
                 + h @ params["w_hh"].T + params["b_hh"])
        i, f, g, o = jnp.split(gates, 4, axis=-1)
        c_new = jax.nn.sigmoid(f) * c + jax.nn.sigmoid(i) * jnp.tanh(g)
        h_new = jax.nn.sigmoid(o) * jnp.tanh(c_new)
        return (h_new, c_new), h_new

    (hT, cT), outs = lax.scan(cell, (h0, c0), jnp.transpose(dec_input, (1, 0, 2)))
    lstm_out = jnp.transpose(outs, (1, 0, 2))                         # (B, Tq, Dq)

    Tq = lstm_out.shape[1]
    Tk = enc_output.shape[1]
    Q = (lstm_out @ params["wq"]).reshape(B, Tq, n_head, d_k)
    K = (enc_output @ params["wk"]).reshape(B, Tk, n_head, d_k)
    V = (enc_output @ params["wv"]).reshape(B, Tk, n_head, d_v)
    s = jnp.einsum("bqhd,bkhd->bhqk", Q, K) / (float(d_k) ** 0.5)
    if mask is not None:
        s = jnp.where(mask[:, None, :, :] == 0, -1e9, s)
    attn = jax.nn.softmax(s, axis=-1)
    ctx = jnp.einsum("bhqk,bkhd->bqhd", attn, V).reshape(B, Tq, n_head * d_v)
    x = ctx @ params["wo"] + lstm_out
    mu = x.mean(-1, keepdims=True)
    var = ((x - mu) ** 2).mean(-1, keepdims=True)
    x = (x - mu) / jnp.sqrt(var + 1e-6) * params["ln1_g"][0] + params["ln1_b"][0]
    hdn = jax.nn.relu(x @ params["w1"] + params["b1"][0])
    y = hdn @ params["w2"] + params["b2"][0] + x
    mu2 = y.mean(-1, keepdims=True)
    var2 = ((y - mu2) ** 2).mean(-1, keepdims=True)
    y = (y - mu2) / jnp.sqrt(var2 + 1e-6) * params["ln2_g"][0] + params["ln2_b"][0]
    return y, attn, hT, cT


# ----------------------------------------------------------------------------
if __name__ == "__main__":
    # DecoderLayer hyper-parameters (small, consistent with the module):
    d_model_i, d_model_o = 8, 8
    Dq = 2 * d_model_o            # LSTM / query width  (d_model_o + d_model_o)
    Dk = 2 * d_model_i            # encoder / key width (d_model_i + d_model_i)
    d_inner = 32
    n_head, d_k, d_v = 2, 8, 8
    B, Tq, Tk = 2, 4, 6           # BATCH_SIZE, decoder seq len, encoder seq len

    key = jax.random.PRNGKey(0)
    ks = jax.random.split(key, 20)
    dec_input = jax.random.normal(ks[0], (B, Tq, Dq), jnp.float32)
    enc_output = jax.random.normal(ks[1], (B, Tk, Dk), jnp.float32)

    sc = 0.1
    params = {
        "w_ih": sc * jax.random.normal(ks[2], (4 * Dq, Dq), jnp.float32),
        "w_hh": sc * jax.random.normal(ks[3], (4 * Dq, Dq), jnp.float32),
        "b_ih": sc * jax.random.normal(ks[4], (4 * Dq,), jnp.float32),
        "b_hh": sc * jax.random.normal(ks[5], (4 * Dq,), jnp.float32),
        "wq": sc * jax.random.normal(ks[6], (Dq, n_head * d_k), jnp.float32),
        "wk": sc * jax.random.normal(ks[7], (Dk, n_head * d_k), jnp.float32),
        "wv": sc * jax.random.normal(ks[8], (Dk, n_head * d_v), jnp.float32),
        "wo": sc * jax.random.normal(ks[9], (n_head * d_v, Dq), jnp.float32),
        "ln1_g": jnp.ones((1, Dq), jnp.float32),
        "ln1_b": jnp.zeros((1, Dq), jnp.float32),
        "w1": sc * jax.random.normal(ks[10], (Dq, d_inner), jnp.float32),
        "b1": sc * jax.random.normal(ks[11], (1, d_inner), jnp.float32),
        "w2": sc * jax.random.normal(ks[12], (d_inner, Dq), jnp.float32),
        "b2": sc * jax.random.normal(ks[13], (1, Dq), jnp.float32),
        "ln2_g": jnp.ones((1, Dq), jnp.float32),
        "ln2_b": jnp.zeros((1, Dq), jnp.float32),
    }

    # ---- case 1: index == 0 (zero-initialised hidden), no mask ----
    dec_out, attn, (h, c) = decoder_layer_forward(
        params, dec_input, enc_output, n_head=n_head, d_k=d_k, d_v=d_v, index=0)
    dec_out = jax.block_until_ready(dec_out)
    ref_out, ref_attn, ref_h, ref_c = reference_forward(
        params, dec_input, enc_output, n_head, d_k, d_v)
    assert dec_out.shape == (B, Tq, Dq)
    assert attn.shape == (B, n_head, Tq, Tk)
    assert jnp.allclose(dec_out, ref_out, atol=1e-2, rtol=1e-2)
    assert jnp.allclose(attn, ref_attn, atol=1e-2, rtol=1e-2)
    assert jnp.allclose(h[0], ref_h, atol=1e-2, rtol=1e-2)
    assert jnp.allclose(c[0], ref_c, atol=1e-2, rtol=1e-2)

    # ---- case 2: index != 0 (carried hidden state) + key-padding attention mask ----
    mask = jnp.ones((B, Tq, Tk), jnp.int32).at[1, :, 4:].set(0)
    dec_out2, attn2, _ = decoder_layer_forward(
        params, dec_input, enc_output, n_head=n_head, d_k=d_k, d_v=d_v,
        index=1, hidden=(h, c), dec_enc_attn_mask=mask)
    dec_out2 = jax.block_until_ready(dec_out2)
    ref_out2, ref_attn2, _, _ = reference_forward(
        params, dec_input, enc_output, n_head, d_k, d_v,
        h0=h[0], c0=c[0], mask=mask)
    assert jnp.allclose(dec_out2, ref_out2, atol=1e-2, rtol=1e-2)
    assert jnp.allclose(attn2, ref_attn2, atol=1e-2, rtol=1e-2)

    print("KERNEL_OK")
</pallas_src>

<mosaic_0001>
module attributes {stable_mosaic.version = 11 : i64} {
  func.func @_decoder_layer_kernel(%arg0: memref<48x16xf32, #tpu.memory_space<vmem>>, %arg1: memref<151x64xf32, #tpu.memory_space<vmem>>, %arg2: memref<28x16xf32, #tpu.memory_space<vmem>>) attributes {dimension_semantics = [], scalar_prefetch = 0 : i64, scratch_operands = 0 : i64, tpu.core_type = #tpu.core_type<tc>} {
    %c0 = arith.constant 0 : index
    %c0_0 = arith.constant 0 : index
    %0 = vector.load %arg0[%c0, %c0_0] : memref<48x16xf32, #tpu.memory_space<vmem>>, vector<8x16xf32>
    %c8 = arith.constant 8 : index
    %c0_1 = arith.constant 0 : index
    %1 = vector.load %arg0[%c8, %c0_1] : memref<48x16xf32, #tpu.memory_space<vmem>>, vector<12x16xf32>
    %c20 = arith.constant 20 : index
    %c0_2 = arith.constant 0 : index
    %2 = vector.load %arg0[%c20, %c0_2] : memref<48x16xf32, #tpu.memory_space<vmem>>, vector<16x12xf32>
    %c36 = arith.constant 36 : index
    %c0_3 = arith.constant 0 : index
    %3 = vector.load %arg0[%c36, %c0_3] : memref<48x16xf32, #tpu.memory_space<vmem>>, vector<2x16xf32>
    %c38 = arith.constant 38 : index
    %c0_4 = arith.constant 0 : index
    %4 = vector.load %arg0[%c38, %c0_4] : memref<48x16xf32, #tpu.memory_space<vmem>>, vector<2x16xf32>
    %c40 = arith.constant 40 : index
    %c0_5 = arith.constant 0 : index
    %5 = vector.load %arg0[%c40, %c0_5] : memref<48x16xf32, #tpu.memory_space<vmem>>, vector<8x12xf32>
    %c0_6 = arith.constant 0 : index
    %c0_7 = arith.constant 0 : index
    %6 = vector.load %arg1[%c0_6, %c0_7] : memref<151x64xf32, #tpu.memory_space<vmem>>, vector<16x64xf32>
    %c16 = arith.constant 16 : index
    %c0_8 = arith.constant 0 : index
    %7 = vector.load %arg1[%c16, %c0_8] : memref<151x64xf32, #tpu.memory_space<vmem>>, vector<16x64xf32>
    %c32 = arith.constant 32 : index
    %c0_9 = arith.constant 0 : index
    %8 = vector.load %arg1[%c32, %c0_9] : memref<151x64xf32, #tpu.memory_space<vmem>>, vector<1x64xf32>
    %c33 = arith.constant 33 : index
    %c0_10 = arith.constant 0 : index
    %9 = vector.load %arg1[%c33, %c0_10] : memref<151x64xf32, #tpu.memory_space<vmem>>, vector<16x16xf32>
    %c49 = arith.constant 49 : index
    %c0_11 = arith.constant 0 : index
    %10 = vector.load %arg1[%c49, %c0_11] : memref<151x64xf32, #tpu.memory_space<vmem>>, vector<16x16xf32>
    %c65 = arith.constant 65 : index
    %c0_12 = arith.constant 0 : index
    %11 = vector.load %arg1[%c65, %c0_12] : memref<151x64xf32, #tpu.memory_space<vmem>>, vector<16x16xf32>
    %c81 = arith.constant 81 : index
    %c0_13 = arith.constant 0 : index
    %12 = vector.load %arg1[%c81, %c0_13] : memref<151x64xf32, #tpu.memory_space<vmem>>, vector<16x16xf32>
    %c97 = arith.constant 97 : index
    %c0_14 = arith.constant 0 : index
    %13 = vector.load %arg1[%c97, %c0_14] : memref<151x64xf32, #tpu.memory_space<vmem>>, vector<1x16xf32>
    %c98 = arith.constant 98 : index
    %c0_15 = arith.constant 0 : index
    %14 = vector.load %arg1[%c98, %c0_15] : memref<151x64xf32, #tpu.memory_space<vmem>>, vector<1x16xf32>
    %c99 = arith.constant 99 : index
    %c0_16 = arith.constant 0 : index
    %15 = vector.load %arg1[%c99, %c0_16] : memref<151x64xf32, #tpu.memory_space<vmem>>, vector<16x32xf32>
    %c115 = arith.constant 115 : index
    %c0_17 = arith.constant 0 : index
    %16 = vector.load %arg1[%c115, %c0_17] : memref<151x64xf32, #tpu.memory_space<vmem>>, vector<1x32xf32>
    %c116 = arith.constant 116 : index
    %c0_18 = arith.constant 0 : index
    %17 = vector.load %arg1[%c116, %c0_18] : memref<151x64xf32, #tpu.memory_space<vmem>>, vector<32x16xf32>
    %c148 = arith.constant 148 : index
    %c0_19 = arith.constant 0 : index
    %18 = vector.load %arg1[%c148, %c0_19] : memref<151x64xf32, #tpu.memory_space<vmem>>, vector<1x16xf32>
    %c149 = arith.constant 149 : index
    %c0_20 = arith.constant 0 : index
    %19 = vector.load %arg1[%c149, %c0_20] : memref<151x64xf32, #tpu.memory_space<vmem>>, vector<1x16xf32>
    %c150 = arith.constant 150 : index
    %c0_21 = arith.constant 0 : index
    %20 = vector.load %arg1[%c150, %c0_21] : memref<151x64xf32, #tpu.memory_space<vmem>>, vector<1x16xf32>
    %cst = arith.constant dense<0.000000e+00> : vector<8x64xf32>
    %21 = tpu.matmul %0, %6, %cst {dimension_numbers = #tpu.dot_dimension_numbers<[1], [0], [0], [1], [0, 0, 1, 1], [], []>} : vector<8x16xf32>, vector<16x64xf32>, vector<8x64xf32> -> vector<8x64xf32>
    %22 = vector.broadcast %8 : vector<1x64xf32> to vector<8x64xf32>
    %23 = arith.addf %21, %22 : vector<8x64xf32>
    %24 = vector.extract_strided_slice %23 {offsets = [0, 0], sizes = [2, 64], strides = [1, 1]} : vector<8x64xf32> to vector<2x64xf32>
    %cst_22 = arith.constant dense<0.000000e+00> : vector<2x64xf32>
    %25 = tpu.matmul %3, %7, %cst_22 {dimension_numbers = #tpu.dot_dimension_numbers<[1], [0], [0], [1], [0, 0, 1, 1], [], []>} : vector<2x16xf32>, vector<16x64xf32>, vector<2x64xf32> -> vector<2x64xf32>
    %26 = arith.addf %24, %25 : vector<2x64xf32>
    %27 = vector.extract_strided_slice %26 {offsets = [0, 0], sizes = [2, 16], strides = [1, 1]} : vector<2x64xf32> to vector<2x16xf32>
    %28 = arith.negf %27 : vector<2x16xf32>
    %29 = math.exp %28 : vector<2x16xf32>
    %cst_23 = arith.constant 1.000000e+00 : f32
    %30 = vector.broadcast %cst_23 : f32 to vector<2x16xf32>
    %31 = arith.addf %30, %29 : vector<2x16xf32>
    %32 = arith.divf %30, %31 : vector<2x16xf32>
    %33 = vector.extract_strided_slice %26 {offsets = [0, 16], sizes = [2, 16], strides = [1, 1]} : vector<2x64xf32> to vector<2x16xf32>
    %34 = arith.negf %33 : vector<2x16xf32>
    %35 = math.exp %34 : vector<2x16xf32>
    %cst_24 = arith.constant 1.000000e+00 : f32
    %36 = vector.broadcast %cst_24 : f32 to vector<2x16xf32>
    %37 = arith.addf %36, %35 : vector<2x16xf32>
    %38 = arith.divf %36, %37 : vector<2x16xf32>
    %39 = vector.extract_strided_slice %26 {offsets = [0, 32], sizes = [2, 16], strides = [1, 1]} : vector<2x64xf32> to vector<2x16xf32>
    %40 = math.tanh %39 : vector<2x16xf32>
    %41 = vector.extract_strided_slice %26 {offsets = [0, 48], sizes = [2, 16], strides = [1, 1]} : vector<2x64xf32> to vector<2x16xf32>
    %42 = arith.negf %41 : vector<2x16xf32>
    %43 = math.exp %42 : vector<2x16xf32>
    %cst_25 = arith.constant 1.000000e+00 : f32
    %44 = vector.broadcast %cst_25 : f32 to vector<2x16xf32>
    %45 = arith.addf %44, %43 : vector<2x16xf32>
    %46 = arith.divf %44, %45 : vector<2x16xf32>
    %47 = arith.mulf %38, %4 : vector<2x16xf32>
    %48 = arith.mulf %32, %40 : vector<2x16xf32>
    %49 = arith.addf %47, %48 : vector<2x16xf32>
    %50 = math.tanh %49 : vector<2x16xf32>
    %51 = arith.mulf %46, %50 : vector<2x16xf32>
    %52 = vector.extract_strided_slice %23 {offsets = [2, 0], sizes = [2, 64], strides = [1, 1]} : vector<8x64xf32> to vector<2x64xf32>
    %cst_26 = arith.constant dense<0.000000e+00> : vector<2x64xf32>
    %53 = tpu.matmul %51, %7, %cst_26 {dimension_numbers = #tpu.dot_dimension_numbers<[1], [0], [0], [1], [0, 0, 1, 1], [], []>} : vector<2x16xf32>, vector<16x64xf32>, vector<2x64xf32> -> vector<2x64xf32>
    %54 = arith.addf %52, %53 : vector<2x64xf32>
    %55 = vector.extract_strided_slice %54 {offsets = [0, 0], sizes = [2, 16], strides = [1, 1]} : vector<2x64xf32> to vector<2x16xf32>
    %56 = arith.negf %55 : vector<2x16xf32>
    %57 = math.exp %56 : vector<2x16xf32>
    %cst_27 = arith.constant 1.000000e+00 : f32
    %58 = vector.broadcast %cst_27 : f32 to vector<2x16xf32>
    %59 = arith.addf %58, %57 : vector<2x16xf32>
    %60 = arith.divf %58, %59 : vector<2x16xf32>
    %61 = vector.extract_strided_slice %54 {offsets = [0, 16], sizes = [2, 16], strides = [1, 1]} : vector<2x64xf32> to vector<2x16xf32>
    %62 = arith.negf %61 : vector<2x16xf32>
    %63 = math.exp %62 : vector<2x16xf32>
    %cst_28 = arith.constant 1.000000e+00 : f32
    %64 = vector.broadcast %cst_28 : f32 to vector<2x16xf32>
    %65 = arith.addf %64, %63 : vector<2x16xf32>
    %66 = arith.divf %64, %65 : vector<2x16xf32>
    %67 = vector.extract_strided_slice %54 {offsets = [0, 32], sizes = [2, 16], strides = [1, 1]} : vector<2x64xf32> to vector<2x16xf32>
    %68 = math.tanh %67 : vector<2x16xf32>
    %69 = vector.extract_strided_slice %54 {offsets = [0, 48], sizes = [2, 16], strides = [1, 1]} : vector<2x64xf32> to vector<2x16xf32>
    %70 = arith.negf %69 : vector<2x16xf32>
    %71 = math.exp %70 : vector<2x16xf32>
    %cst_29 = arith.constant 1.000000e+00 : f32
    %72 = vector.broadcast %cst_29 : f32 to vector<2x16xf32>
    %73 = arith.addf %72, %71 : vector<2x16xf32>
    %74 = arith.divf %72, %73 : vector<2x16xf32>
    %75 = arith.mulf %66, %49 : vector<2x16xf32>
    %76 = arith.mulf %60, %68 : vector<2x16xf32>
    %77 = arith.addf %75, %76 : vector<2x16xf32>
    %78 = math.tanh %77 : vector<2x16xf32>
    %79 = arith.mulf %74, %78 : vector<2x16xf32>
    %80 = vector.extract_strided_slice %23 {offsets = [4, 0], sizes = [2, 64], strides = [1, 1]} : vector<8x64xf32> to vector<2x64xf32>
    %cst_30 = arith.constant dense<0.000000e+00> : vector<2x64xf32>
    %81 = tpu.matmul %79, %7, %cst_30 {dimension_numbers = #tpu.dot_dimension_numbers<[1], [0], [0], [1], [0, 0, 1, 1], [], []>} : vector<2x16xf32>, vector<16x64xf32>, vector<2x64xf32> -> vector<2x64xf32>
    %82 = arith.addf %80, %81 : vector<2x64xf32>
    %83 = vector.extract_strided_slice %82 {offsets = [0, 0], sizes = [2, 16], strides = [1, 1]} : vector<2x64xf32> to vector<2x16xf32>
    %84 = arith.negf %83 : vector<2x16xf32>
    %85 = math.exp %84 : vector<2x16xf32>
    %cst_31 = arith.constant 1.000000e+00 : f32
    %86 = vector.broadcast %cst_31 : f32 to vector<2x16xf32>
    %87 = arith.addf %86, %85 : vector<2x16xf32>
    %88 = arith.divf %86, %87 : vector<2x16xf32>
    %89 = vector.extract_strided_slice %82 {offsets = [0, 16], sizes = [2, 16], strides = [1, 1]} : vector<2x64xf32> to vector<2x16xf32>
    %90 = arith.negf %89 : vector<2x16xf32>
    %91 = math.exp %90 : vector<2x16xf32>
    %cst_32 = arith.constant 1.000000e+00 : f32
    %92 = vector.broadcast %cst_32 : f32 to vector<2x16xf32>
    %93 = arith.addf %92, %91 : vector<2x16xf32>
    %94 = arith.divf %92, %93 : vector<2x16xf32>
    %95 = vector.extract_strided_slice %82 {offsets = [0, 32], sizes = [2, 16], strides = [1, 1]} : vector<2x64xf32> to vector<2x16xf32>
    %96 = math.tanh %95 : vector<2x16xf32>
    %97 = vector.extract_strided_slice %82 {offsets = [0, 48], sizes = [2, 16], strides = [1, 1]} : vector<2x64xf32> to vector<2x16xf32>
    %98 = arith.negf %97 : vector<2x16xf32>
    %99 = math.exp %98 : vector<2x16xf32>
    %cst_33 = arith.constant 1.000000e+00 : f32
    %100 = vector.broadcast %cst_33 : f32 to vector<2x16xf32>
    %101 = arith.addf %100, %99 : vector<2x16xf32>
    %102 = arith.divf %100, %101 : vector<2x16xf32>
    %103 = arith.mulf %94, %77 : vector<2x16xf32>
    %104 = arith.mulf %88, %96 : vector<2x16xf32>
    %105 = arith.addf %103, %104 : vector<2x16xf32>
    %106 = math.tanh %105 : vector<2x16xf32>
    %107 = arith.mulf %102, %106 : vector<2x16xf32>
    %108 = vector.extract_strided_slice %23 {offsets = [6, 0], sizes = [2, 64], strides = [1, 1]} : vector<8x64xf32> to vector<2x64xf32>
    %cst_34 = arith.constant dense<0.000000e+00> : vector<2x64xf32>
    %109 = tpu.matmul %107, %7, %cst_34 {dimension_numbers = #tpu.dot_dimension_numbers<[1], [0], [0], [1], [0, 0, 1, 1], [], []>} : vector<2x16xf32>, vector<16x64xf32>, vector<2x64xf32> -> vector<2x64xf32>
    %110 = arith.addf %108, %109 : vector<2x64xf32>
    %111 = vector.extract_strided_slice %110 {offsets = [0, 0], sizes = [2, 16], strides = [1, 1]} : vector<2x64xf32> to vector<2x16xf32>
    %112 = arith.negf %111 : vector<2x16xf32>
    %113 = math.exp %112 : vector<2x16xf32>
    %cst_35 = arith.constant 1.000000e+00 : f32
    %114 = vector.broadcast %cst_35 : f32 to vector<2x16xf32>
    %115 = arith.addf %114, %113 : vector<2x16xf32>
    %116 = arith.divf %114, %115 : vector<2x16xf32>
    %117 = vector.extract_strided_slice %110 {offsets = [0, 16], sizes = [2, 16], strides = [1, 1]} : vector<2x64xf32> to vector<2x16xf32>
    %118 = arith.negf %117 : vector<2x16xf32>
    %119 = math.exp %118 : vector<2x16xf32>
    %cst_36 = arith.constant 1.000000e+00 : f32
    %120 = vector.broadcast %cst_36 : f32 to vector<2x16xf32>
    %121 = arith.addf %120, %119 : vector<2x16xf32>
    %122 = arith.divf %120, %121 : vector<2x16xf32>
    %123 = vector.extract_strided_slice %110 {offsets = [0, 32], sizes = [2, 16], strides = [1, 1]} : vector<2x64xf32> to vector<2x16xf32>
    %124 = math.tanh %123 : vector<2x16xf32>
    %125 = vector.extract_strided_slice %110 {offsets = [0, 48], sizes = [2, 16], strides = [1, 1]} : vector<2x64xf32> to vector<2x16xf32>
    %126 = arith.negf %125 : vector<2x16xf32>
    %127 = math.exp %126 : vector<2x16xf32>
    %cst_37 = arith.constant 1.000000e+00 : f32
    %128 = vector.broadcast %cst_37 : f32 to vector<2x16xf32>
    %129 = arith.addf %128, %127 : vector<2x16xf32>
    %130 = arith.divf %128, %129 : vector<2x16xf32>
    %131 = arith.mulf %122, %105 : vector<2x16xf32>
    %132 = arith.mulf %116, %124 : vector<2x16xf32>
    %133 = arith.addf %131, %132 : vector<2x16xf32>
    %134 = math.tanh %133 : vector<2x16xf32>
    %135 = arith.mulf %130, %134 : vector<2x16xf32>
    %136 = tpu.concatenate %51, %79, %107, %135 in 0 : vector<2x16xf32>, vector<2x16xf32>, vector<2x16xf32>, vector<2x16xf32> -> vector<8x16xf32>
    %cst_38 = arith.constant dense<0.000000e+00> : vector<8x16xf32>
    %137 = tpu.matmul %136, %9, %cst_38 {dimension_numbers = #tpu.dot_dimension_numbers<[1], [0], [0], [1], [0, 0, 1, 1], [], []>} : vector<8x16xf32>, vector<16x16xf32>, vector<8x16xf32> -> vector<8x16xf32>
    %cst_39 = arith.constant dense<0.000000e+00> : vector<16x12xf32>
    %138 = tpu.matmul %10, %2, %cst_39 {dimension_numbers = #tpu.dot_dimension_numbers<[1], [0], [0], [1], [0, 0, 1, 1], [], []>} : vector<16x16xf32>, vector<16x12xf32>, vector<16x12xf32> -> vector<16x12xf32>
    %cst_40 = arith.constant dense<0.000000e+00> : vector<12x16xf32>
    %139 = tpu.matmul %1, %11, %cst_40 {dimension_numbers = #tpu.dot_dimension_numbers<[1], [0], [0], [1], [0, 0, 1, 1], [], []>} : vector<12x16xf32>, vector<16x16xf32>, vector<12x16xf32> -> vector<12x16xf32>
    %140 = vector.extract_strided_slice %137 {offsets = [0, 0], sizes = [8, 8], strides = [1, 1]} : vector<8x16xf32> to vector<8x8xf32>
    %141 = vector.extract_strided_slice %138 {offsets = [0, 0], sizes = [8, 12], strides = [1, 1]} : vector<16x12xf32> to vector<8x12xf32>
    %cst_41 = arith.constant dense<0.000000e+00> : vector<8x12xf32>
    %142 = tpu.matmul %140, %141, %cst_41 {dimension_numbers = #tpu.dot_dimension_numbers<[1], [0], [0], [1], [0, 0, 1, 1], [], []>} : vector<8x8xf32>, vector<8x12xf32>, vector<8x12xf32> -> vector<8x12xf32>
    %143 = arith.addf %142, %5 : vector<8x12xf32>
    %cst_42 = arith.constant dense<0xFF800000> : vector<8xf32>
    %144 = vector.multi_reduction <maximumf>, %143, %cst_42 [1] : vector<8x12xf32> to vector<8xf32>
    %145 = vector.shape_cast %144 : vector<8xf32> to vector<8x1xf32>
    %146 = vector.broadcast %145 : vector<8x1xf32> to vector<8x12xf32>
    %147 = arith.subf %143, %146 : vector<8x12xf32>
    %148 = math.exp %147 : vector<8x12xf32>
    %cst_43 = arith.constant dense<0.000000e+00> : vector<8xf32>
    %149 = vector.multi_reduction <add>, %148, %cst_43 [1] : vector<8x12xf32> to vector<8xf32>
    %150 = vector.shape_cast %149 : vector<8xf32> to vector<8x1xf32>
    %151 = tpu.reciprocal %150 {approx = true} : vector<8x1xf32> -> vector<8x1xf32>
    %152 = vector.broadcast %151 : vector<8x1xf32> to vector<8x12xf32>
    %153 = arith.mulf %148, %152 : vector<8x12xf32>
    %154 = vector.extract_strided_slice %139 {offsets = [0, 0], sizes = [12, 8], strides = [1, 1]} : vector<12x16xf32> to vector<12x8xf32>
    %cst_44 = arith.constant dense<0.000000e+00> : vector<8x8xf32>
    %155 = tpu.matmul %153, %154, %cst_44 {dimension_numbers = #tpu.dot_dimension_numbers<[1], [0], [0], [1], [0, 0, 1, 1], [], []>} : vector<8x12xf32>, vector<12x8xf32>, vector<8x8xf32> -> vector<8x8xf32>
    %156 = vector.extract_strided_slice %137 {offsets = [0, 8], sizes = [8, 8], strides = [1, 1]} : vector<8x16xf32> to vector<8x8xf32>
    %157 = vector.extract_strided_slice %138 {offsets = [8, 0], sizes = [8, 12], strides = [1, 1]} : vector<16x12xf32> to vector<8x12xf32>
    %cst_45 = arith.constant dense<0.000000e+00> : vector<8x12xf32>
    %158 = tpu.matmul %156, %157, %cst_45 {dimension_numbers = #tpu.dot_dimension_numbers<[1], [0], [0], [1], [0, 0, 1, 1], [], []>} : vector<8x8xf32>, vector<8x12xf32>, vector<8x12xf32> -> vector<8x12xf32>
    %159 = arith.addf %158, %5 : vector<8x12xf32>
    %cst_46 = arith.constant dense<0xFF800000> : vector<8xf32>
    %160 = vector.multi_reduction <maximumf>, %159, %cst_46 [1] : vector<8x12xf32> to vector<8xf32>
    %161 = vector.shape_cast %160 : vector<8xf32> to vector<8x1xf32>
    %162 = vector.broadcast %161 : vector<8x1xf32> to vector<8x12xf32>
    %163 = arith.subf %159, %162 : vector<8x12xf32>
    %164 = math.exp %163 : vector<8x12xf32>
    %cst_47 = arith.constant dense<0.000000e+00> : vector<8xf32>
    %165 = vector.multi_reduction <add>, %164, %cst_47 [1] : vector<8x12xf32> to vector<8xf32>
    %166 = vector.shape_cast %165 : vector<8xf32> to vector<8x1xf32>
    %167 = tpu.reciprocal %166 {approx = true} : vector<8x1xf32> -> vector<8x1xf32>
    %168 = vector.broadcast %167 : vector<8x1xf32> to vector<8x12xf32>
    %169 = arith.mulf %164, %168 : vector<8x12xf32>
    %170 = vector.extract_strided_slice %139 {offsets = [0, 8], sizes = [12, 8], strides = [1, 1]} : vector<12x16xf32> to vector<12x8xf32>
    %cst_48 = arith.constant dense<0.000000e+00> : vector<8x8xf32>
    %171 = tpu.matmul %169, %170, %cst_48 {dimension_numbers = #tpu.dot_dimension_numbers<[1], [0], [0], [1], [0, 0, 1, 1], [], []>} : vector<8x12xf32>, vector<12x8xf32>, vector<8x8xf32> -> vector<8x8xf32>
    %172 = tpu.concatenate %155, %171 in 1 : vector<8x8xf32>, vector<8x8xf32> -> vector<8x16xf32>
    %cst_49 = arith.constant dense<0.000000e+00> : vector<8x16xf32>
    %173 = tpu.matmul %172, %12, %cst_49 {dimension_numbers = #tpu.dot_dimension_numbers<[1], [0], [0], [1], [0, 0, 1, 1], [], []>} : vector<8x16xf32>, vector<16x16xf32>, vector<8x16xf32> -> vector<8x16xf32>
    %174 = arith.addf %136, %173 : vector<8x16xf32>
    %cst_50 = arith.constant dense<0.000000e+00> : vector<8xf32>
    %175 = vector.multi_reduction <add>, %174, %cst_50 [1] : vector<8x16xf32> to vector<8xf32>
    %176 = vector.shape_cast %175 : vector<8xf32> to vector<8x1xf32>
    %cst_51 = arith.constant 1.600000e+01 : f32
    %177 = vector.broadcast %cst_51 : f32 to vector<8x1xf32>
    %178 = arith.divf %176, %177 : vector<8x1xf32>
    %179 = vector.broadcast %178 : vector<8x1xf32> to vector<8x16xf32>
    %180 = arith.subf %174, %179 : vector<8x16xf32>
    %181 = vector.broadcast %178 : vector<8x1xf32> to vector<8x16xf32>
    %182 = arith.subf %174, %181 : vector<8x16xf32>
    %183 = arith.mulf %180, %182 : vector<8x16xf32>
    %cst_52 = arith.constant dense<0.000000e+00> : vector<8xf32>
    %184 = vector.multi_reduction <add>, %183, %cst_52 [1] : vector<8x16xf32> to vector<8xf32>
    %185 = vector.shape_cast %184 : vector<8xf32> to vector<8x1xf32>
    %cst_53 = arith.constant 1.600000e+01 : f32
    %186 = vector.broadcast %cst_53 : f32 to vector<8x1xf32>
    %187 = arith.divf %185, %186 : vector<8x1xf32>
    %188 = vector.broadcast %178 : vector<8x1xf32> to vector<8x16xf32>
    %189 = arith.subf %174, %188 : vector<8x16xf32>
    %cst_54 = arith.constant 9.99999997E-7 : f32
    %190 = vector.broadcast %cst_54 : f32 to vector<8x1xf32>
    %191 = arith.addf %187, %190 : vector<8x1xf32>
    %192 = math.rsqrt %191 : vector<8x1xf32>
    %193 = vector.broadcast %192 : vector<8x1xf32> to vector<8x16xf32>
    %194 = arith.mulf %189, %193 : vector<8x16xf32>
    %195 = vector.broadcast %13 : vector<1x16xf32> to vector<8x16xf32>
    %196 = arith.mulf %194, %195 : vector<8x16xf32>
    %197 = vector.broadcast %14 : vector<1x16xf32> to vector<8x16xf32>
    %198 = arith.addf %196, %197 : vector<8x16xf32>
    %cst_55 = arith.constant dense<0.000000e+00> : vector<8x32xf32>
    %199 = tpu.matmul %198, %15, %cst_55 {dimension_numbers = #tpu.dot_dimension_numbers<[1], [0], [0], [1], [0, 0, 1, 1], [], []>} : vector<8x16xf32>, vector<16x32xf32>, vector<8x32xf32> -> vector<8x32xf32>
    %200 = vector.broadcast %16 : vector<1x32xf32> to vector<8x32xf32>
    %201 = arith.addf %199, %200 : vector<8x32xf32>
    %cst_56 = arith.constant 0.000000e+00 : f32
    %202 = vector.broadcast %cst_56 : f32 to vector<8x32xf32>
    %203 = arith.maximumf %201, %202 : vector<8x32xf32>
    %cst_57 = arith.constant dense<0.000000e+00> : vector<8x16xf32>
    %204 = tpu.matmul %203, %17, %cst_57 {dimension_numbers = #tpu.dot_dimension_numbers<[1], [0], [0], [1], [0, 0, 1, 1], [], []>} : vector<8x32xf32>, vector<32x16xf32>, vector<8x16xf32> -> vector<8x16xf32>
    %205 = vector.broadcast %18 : vector<1x16xf32> to vector<8x16xf32>
    %206 = arith.addf %204, %205 : vector<8x16xf32>
    %207 = arith.addf %206, %198 : vector<8x16xf32>
    %cst_58 = arith.constant dense<0.000000e+00> : vector<8xf32>
    %208 = vector.multi_reduction <add>, %207, %cst_58 [1] : vector<8x16xf32> to vector<8xf32>
    %209 = vector.shape_cast %208 : vector<8xf32> to vector<8x1xf32>
    %cst_59 = arith.constant 1.600000e+01 : f32
    %210 = vector.broadcast %cst_59 : f32 to vector<8x1xf32>
    %211 = arith.divf %209, %210 : vector<8x1xf32>
    %212 = vector.broadcast %211 : vector<8x1xf32> to vector<8x16xf32>
    %213 = arith.subf %207, %212 : vector<8x16xf32>
    %214 = vector.broadcast %211 : vector<8x1xf32> to vector<8x16xf32>
    %215 = arith.subf %207, %214 : vector<8x16xf32>
    %216 = arith.mulf %213, %215 : vector<8x16xf32>
    %cst_60 = arith.constant dense<0.000000e+00> : vector<8xf32>
    %217 = vector.multi_reduction <add>, %216, %cst_60 [1] : vector<8x16xf32> to vector<8xf32>
    %218 = vector.shape_cast %217 : vector<8xf32> to vector<8x1xf32>
    %cst_61 = arith.constant 1.600000e+01 : f32
    %219 = vector.broadcast %cst_61 : f32 to vector<8x1xf32>
    %220 = arith.divf %218, %219 : vector<8x1xf32>
    %221 = vector.broadcast %211 : vector<8x1xf32> to vector<8x16xf32>
    %222 = arith.subf %207, %221 : vector<8x16xf32>
    %cst_62 = arith.constant 9.99999997E-7 : f32
    %223 = vector.broadcast %cst_62 : f32 to vector<8x1xf32>
    %224 = arith.addf %220, %223 : vector<8x1xf32>
    %225 = math.rsqrt %224 : vector<8x1xf32>
    %226 = vector.broadcast %225 : vector<8x1xf32> to vector<8x16xf32>
    %227 = arith.mulf %222, %226 : vector<8x16xf32>
    %228 = vector.broadcast %19 : vector<1x16xf32> to vector<8x16xf32>
    %229 = arith.mulf %227, %228 : vector<8x16xf32>
    %230 = vector.broadcast %20 : vector<1x16xf32> to vector<8x16xf32>
    %231 = arith.addf %229, %230 : vector<8x16xf32>
    %cst_63 = arith.constant 0.000000e+00 : f32
    %232 = vector.broadcast %cst_63 : f32 to vector<8x4xf32>
    %233 = tpu.concatenate %153, %232 in 1 : vector<8x12xf32>, vector<8x4xf32> -> vector<8x16xf32>
    %cst_64 = arith.constant 0.000000e+00 : f32
    %234 = vector.broadcast %cst_64 : f32 to vector<8x4xf32>
    %235 = tpu.concatenate %169, %234 in 1 : vector<8x12xf32>, vector<8x4xf32> -> vector<8x16xf32>
    %236 = tpu.concatenate %231, %135, %133, %233, %235 in 0 : vector<8x16xf32>, vector<2x16xf32>, vector<2x16xf32>, vector<8x16xf32>, vector<8x16xf32> -> vector<28x16xf32>
    %c0_65 = arith.constant 0 : index
    %c0_66 = arith.constant 0 : index
    %237 = vector.load %arg2[%c0_65, %c0_66] : memref<28x16xf32, #tpu.memory_space<vmem>>, vector<28x16xf32>
    tpu.vector_store %arg2[%c0_65, %c0_66], %236 {strides = array<i32>} : memref<28x16xf32, #tpu.memory_space<vmem>>, vector<28x16xf32>,
    return
  }
}

</mosaic_0001>

<llo_original>
// kernel: decoder_layer_forward.1
$region0: #{decoder_layer_forward.1}
  #allocation0 [shape = 'u32[]', space=smem, size = 0x4, offset = 0x4, fixed_abs, tag = 'smem constant byte address 0x4 - core index']
  #allocation1 [shape = 'u32[144,128]{1,0:T(1,128)}', space=vmem, size = 0x12000, scoped, tag = 'internal scratch']
  %s0 = inlined_call_operand.vmem [shape: f32[48,16], index: 0, kind: input, shape index: {}]
  %s1 = inlined_call_operand.vmem [shape: f32[151,64], index: 1, kind: input, shape index: {}]
  %s2 = inlined_call_operand.vmem [shape: f32[28,16], index: 2, kind: output, shape index: {}]
  %s3 = sld [smem:[#allocation0]]
  $region18: #{decoder_layer_forward.1} parent=0
    _
  %s5 = ssub.s32 1, %s3
  %s6 = scalar_select 0, %s5, %s3
  // Predicated region
  $region2: #{decoder_layer_forward.1} parent=0 // pred_check
    _
  $region3: #{decoder_layer_forward.1} parent=0 // pred_check_branch
    %8 = sbr.rel (0) target = $region5
  $region4: #{decoder_layer_forward.1} parent=0 // pred_region
    _
  $region5: #{decoder_layer_forward.1} parent=0 // pred_fallthru
    _
  // Predicated region
  $region6: #{decoder_layer_forward.1} parent=0 // pred_check
    _
  $region7: #{decoder_layer_forward.1} parent=0 // pred_check_branch
    %10 = sbr.rel (0) target = $region9
  $region8: #{decoder_layer_forward.1} parent=0 // pred_region
    _
  $region9: #{decoder_layer_forward.1} parent=0 // pred_fallthru
    _
  %v11 = vld [vmem:[%s0] sm:$0xff]
  %v12 = vld [vmem:[%s0 + $0x8] sm:$0xff]
  %v13 = vld [vmem:[%s0 + $0x10] sm:$0xf]
  %v14 = vld [vmem:[%s0 + $0x14] sm:$0xff]
  %v15 = vld [vmem:[%s0 + $0x1c] sm:$0xff]
  %v16 = vld [vmem:[%s0 + $0x24] sm:$0x3]
  %v17 = vld [vmem:[%s0 + $0x26] sm:$0x3]
  %v18 = vld [vmem:[%s0 + $0x28] sm:$0xff]
  %v19 = vld [vmem:[%s1] sm:$0xff]
  %v20 = vld [vmem:[%s1 + $0x8] sm:$0xff]
  %v21 = vld [vmem:[%s1 + $0x10] sm:$0xff]
  %v22 = vld [vmem:[%s1 + $0x18] sm:$0xff]
  %v23 = vld [vmem:[%s1 + $0x20] sm:$0x1]
  %v24 = vld [vmem:[%s1 + $0x21] sm:$0xff]
  %v25 = vld [vmem:[%s1 + $0x29] sm:$0xff]
  %v26 = vld [vmem:[%s1 + $0x31] sm:$0xff]
  %v27 = vld [vmem:[%s1 + $0x39] sm:$0xff]
  %v28 = vld [vmem:[%s1 + $0x41] sm:$0xff]
  %v29 = vld [vmem:[%s1 + $0x49] sm:$0xff]
  %v30 = vld [vmem:[%s1 + $0x51] sm:$0xff]
  %v31 = vld [vmem:[%s1 + $0x59] sm:$0xff]
  %v32 = vld [vmem:[%s1 + $0x61] sm:$0x1]
  %v33 = vld [vmem:[%s1 + $0x62] sm:$0x1]
  %v34 = vld [vmem:[%s1 + $0x63] sm:$0xff]
  %v35 = vld [vmem:[%s1 + $0x6b] sm:$0xff]
  %v36 = vld [vmem:[%s1 + $0x73] sm:$0x1]
  %v37 = vld [vmem:[%s1 + $0x74] sm:$0xff]
  %v38 = vld [vmem:[%s1 + $0x7c] sm:$0xff]
  %v39 = vld [vmem:[%s1 + $0x84] sm:$0xff]
  %v40 = vld [vmem:[%s1 + $0x8c] sm:$0xff]
  %v41 = vld [vmem:[%s1 + $0x94] sm:$0x1]
  %v42 = vld [vmem:[%s1 + $0x95] sm:$0x1]
  %v43 = vld [vmem:[%s1 + $0x96] sm:$0x1]
  %v44 = vlaneseq
  %v45 = vshrl.u32 %v44, 7
  %v46 = vsub.s32 0, %v45
  %v47 = vrot.slane %v23, %v46
  %vm48 = vcmask 130048
  %v50 = vsel %vm48, %v11, 0
  %52 = vmatprep.subr.mxu0 0.0
  %53 = vmatpush1.msra.mxu0 0.0
  %54 = vmatprep.subr.mxu0 0.0
  %55 = vmatpush1.msra.mxu0 0.0
  %56 = vmatprep.subr.mxu0 0.0
  %57 = vmatpush1.msra.mxu0 0.0
  %58 = vmatprep.subr.mxu0 0.0
  %59 = vmatpush1.msra.mxu0 0.0
  %60 = vmatprep.subr.mxu0 0.0
  %61 = vmatpush1.msra.mxu0 0.0
  %62 = vmatprep.subr.mxu0 0.0
  %63 = vmatpush1.msra.mxu0 0.0
  %64 = vmatprep.subr.mxu0 0.0
  %65 = vmatpush1.msra.mxu0 0.0
  %66 = vmatprep.subr.mxu0 0.0
  %67 = vmatpush1.msra.mxu0 0.0
  %68 = vmatprep.subr.mxu0 0.0
  %69 = vmatpush1.msra.mxu0 0.0
  %70 = vmatprep.subr.mxu0 0.0
  %71 = vmatpush1.msra.mxu0 0.0
  %72 = vmatprep.subr.mxu0 0.0
  %73 = vmatpush1.msra.mxu0 0.0
  %74 = vmatprep.subr.mxu0 0.0
  %75 = vmatpush1.msra.mxu0 0.0
  %76 = vmatprep.subr.mxu0 0.0
  %77 = vmatpush1.msra.mxu0 0.0
  %78 = vmatprep.subr.mxu0 0.0
  %79 = vmatpush1.msra.mxu0 0.0
  %80 = vmatprep.subr.mxu0 0.0
  %81 = vmatpush1.msra.mxu0 %v20
  %82 = vmatprep.subr.mxu0 0.0
  %83 = vmatpush1.msra.mxu0 %v19
  %84 = vmatprep.subr.mxu0 0.0
  %85 = vmatpush2.msra.mxu0 0.0
  %86 = vmatprep.subr.mxu0 0.0
  %87 = vmatpush2.msra.mxu0 0.0
  %88 = vmatprep.subr.mxu0 0.0
  %89 = vmatpush2.msra.mxu0 0.0
  %90 = vmatprep.subr.mxu0 0.0
  %91 = vmatpush2.msra.mxu0 0.0
  %92 = vmatprep.subr.mxu0 0.0
  %93 = vmatpush2.msra.mxu0 0.0
  %94 = vmatprep.subr.mxu0 0.0
  %95 = vmatpush2.msra.mxu0 0.0
  %96 = vmatprep.subr.mxu0 0.0
  %97 = vmatpush2.msra.mxu0 0.0
  %98 = vmatprep.subr.mxu0 0.0
  %99 = vmatpush2.msra.mxu0 0.0
  %100 = vmatprep.subr.mxu0 0.0
  %101 = vmatpush2.msra.mxu0 0.0
  %102 = vmatprep.subr.mxu0 0.0
  %103 = vmatpush2.msra.mxu0 0.0
  %104 = vmatprep.subr.mxu0 0.0
  %105 = vmatpush2.msra.mxu0 0.0
  %106 = vmatprep.subr.mxu0 0.0
  %107 = vmatpush2.msra.mxu0 0.0
  %108 = vmatprep.subr.mxu0 0.0
  %109 = vmatpush2.msra.mxu0 0.0
  %110 = vmatprep.subr.mxu0 0.0
  %111 = vmatpush2.msra.mxu0 0.0
  %112 = vmatprep.subr.mxu0 0.0
  %113 = vmatpush2.msra.mxu0 0.0
  %114 = vmatprep.subr.mxu0 0.0
  %115 = vmatpush2.msra.mxu0 0.0
  %116 = vmatprep.mubr.f32.mxu0 0.0
  %117 = vmatmul.mubr.f32.gmra.mxu0 %v50
  %v118 = vpop.f32.mrf.mxu0
  %v119 = vadd.f32 %v47, %v118
  %v120 = vpop.f32.mrf.mxu0
  %121 = vdwg.mxu0
  %v123 = vsel %vm48, %v16, 0
  %125 = vmatprep.subr.mxu0 0.0
  %126 = vmatpush1.msra.mxu0 0.0
  %127 = vmatprep.subr.mxu0 0.0
  %128 = vmatpush1.msra.mxu0 0.0
  %129 = vmatprep.subr.mxu0 0.0
  %130 = vmatpush1.msra.mxu0 0.0
  %131 = vmatprep.subr.mxu0 0.0
  %132 = vmatpush1.msra.mxu0 0.0
  %133 = vmatprep.subr.mxu0 0.0
  %134 = vmatpush1.msra.mxu0 0.0
  %135 = vmatprep.subr.mxu0 0.0
  %136 = vmatpush1.msra.mxu0 0.0
  %137 = vmatprep.subr.mxu0 0.0
  %138 = vmatpush1.msra.mxu0 0.0
  %139 = vmatprep.subr.mxu0 0.0
  %140 = vmatpush1.msra.mxu0 0.0
  %141 = vmatprep.subr.mxu0 0.0
  %142 = vmatpush1.msra.mxu0 0.0
  %143 = vmatprep.subr.mxu0 0.0
  %144 = vmatpush1.msra.mxu0 0.0
  %145 = vmatprep.subr.mxu0 0.0
  %146 = vmatpush1.msra.mxu0 0.0
  %147 = vmatprep.subr.mxu0 0.0
  %148 = vmatpush1.msra.mxu0 0.0
  %149 = vmatprep.subr.mxu0 0.0
  %150 = vmatpush1.msra.mxu0 0.0
  %151 = vmatprep.subr.mxu0 0.0
  %152 = vmatpush1.msra.mxu0 0.0
  %153 = vmatprep.subr.mxu0 0.0
  %154 = vmatpush1.msra.mxu0 %v22
  %155 = vmatprep.subr.mxu0 0.0
  %156 = vmatpush1.msra.mxu0 %v21
  %157 = vmatprep.subr.mxu0 0.0
  %158 = vmatpush2.msra.mxu0 0.0
  %159 = vmatprep.subr.mxu0 0.0
  %160 = vmatpush2.msra.mxu0 0.0
  %161 = vmatprep.subr.mxu0 0.0
  %162 = vmatpush2.msra.mxu0 0.0
  %163 = vmatprep.subr.mxu0 0.0
  %164 = vmatpush2.msra.mxu0 0.0
  %165 = vmatprep.subr.mxu0 0.0
  %166 = vmatpush2.msra.mxu0 0.0
  %167 = vmatprep.subr.mxu0 0.0
  %168 = vmatpush2.msra.mxu0 0.0
  %169 = vmatprep.subr.mxu0 0.0
  %170 = vmatpush2.msra.mxu0 0.0
  %171 = vmatprep.subr.mxu0 0.0
  %172 = vmatpush2.msra.mxu0 0.0
  %173 = vmatprep.subr.mxu0 0.0
  %174 = vmatpush2.msra.mxu0 0.0
  %175 = vmatprep.subr.mxu0 0.0
  %176 = vmatpush2.msra.mxu0 0.0
  %177 = vmatprep.subr.mxu0 0.0
  %178 = vmatpush2.msra.mxu0 0.0
  %179 = vmatprep.subr.mxu0 0.0
  %180 = vmatpush2.msra.mxu0 0.0
  %181 = vmatprep.subr.mxu0 0.0
  %182 = vmatpush2.msra.mxu0 0.0
  %183 = vmatprep.subr.mxu0 0.0
  %184 = vmatpush2.msra.mxu0 0.0
  %185 = vmatprep.subr.mxu0 0.0
  %186 = vmatpush2.msra.mxu0 0.0
  %187 = vmatprep.subr.mxu0 0.0
  %188 = vmatpush2.msra.mxu0 0.0
  %189 = vmatprep.mubr.f32.mxu0 0.0
  %190 = vmatmul.mubr.f32.gmra.mxu0 %v123
  %v191 = vpop.f32.mrf.mxu0
  %v192 = vadd.f32 0.0, %v191
  %v193 = vpop.f32.mrf.mxu0
  %194 = vdwg.mxu0
  %v195 = vadd.f32 %v119, %v192
  %v196 = vxor.u32 %v195, 2147483648
  %v197 = vmul.f32 %v196, 1.442695
  %v198 = vpow.pop %v197
  %v199 = vadd.f32 %v198, 1.0
  %v200 = vrcp.pop %v199
  %v201 = vmul.f32 1.0, %v200
  %v202 = vtanh.pop %v195
  %204 = vrot.lane.b32.xlu0 %v17, 16
  %v205 = vpop.permute.xlu0 %204
  %v207 = vmul.f32 %v201, %v205
  %209 = vrot.lane.b32.xlu0 %v202, 96
  %v210 = vpop.permute.xlu0 %209
  %v212 = vmul.f32 %v201, %v210
  %214 = vrot.lane.b32.xlu0 %v212, 16
  %v215 = vpop.permute.xlu0 %214
  %v217 = vadd.f32 %v207, %v215
  %v218 = vtanh.pop %v217
  %220 = vrot.lane.b32.xlu0 %v218, 32
  %v221 = vpop.permute.xlu0 %220
  %v223 = vmul.f32 %v201, %v221
  %225 = vrot.lane.b32.xlu0 %v223, 80
  %v226 = vpop.permute.xlu0 %225
  %v227 = vsel %vm48, %v226, 0
  %229 = vmatprep.subr.mxu0 0.0
  %230 = vmatpush1.msra.mxu0 0.0
  %231 = vmatprep.subr.mxu0 0.0
  %232 = vmatpush1.msra.mxu0 0.0
  %233 = vmatprep.subr.mxu0 0.0
  %234 = vmatpush1.msra.mxu0 0.0
  %235 = vmatprep.subr.mxu0 0.0
  %236 = vmatpush1.msra.mxu0 0.0
  %237 = vmatprep.subr.mxu0 0.0
  %238 = vmatpush1.msra.mxu0 0.0
  %239 = vmatprep.subr.mxu0 0.0
  %240 = vmatpush1.msra.mxu0 0.0
  %241 = vmatprep.subr.mxu0 0.0
  %242 = vmatpush1.msra.mxu0 0.0
  %243 = vmatprep.subr.mxu0 0.0
  %244 = vmatpush1.msra.mxu0 0.0
  %245 = vmatprep.subr.mxu0 0.0
  %246 = vmatpush1.msra.mxu0 0.0
  %247 = vmatprep.subr.mxu0 0.0
  %248 = vmatpush1.msra.mxu0 0.0
  %249 = vmatprep.subr.mxu0 0.0
  %250 = vmatpush1.msra.mxu0 0.0
  %251 = vmatprep.subr.mxu0 0.0
  %252 = vmatpush1.msra.mxu0 0.0
  %253 = vmatprep.subr.mxu0 0.0
  %254 = vmatpush1.msra.mxu0 0.0
  %255 = vmatprep.subr.mxu0 0.0
  %256 = vmatpush1.msra.mxu0 0.0
  %257 = vmatprep.subr.mxu0 0.0
  %258 = vmatpush1.msra.mxu0 %v22
  %259 = vmatprep.subr.mxu0 0.0
  %260 = vmatpush1.msra.mxu0 %v21
  %261 = vmatprep.subr.mxu0 0.0
  %262 = vmatpush2.msra.mxu0 0.0
  %263 = vmatprep.subr.mxu0 0.0
  %264 = vmatpush2.msra.mxu0 0.0
  %265 = vmatprep.subr.mxu0 0.0
  %266 = vmatpush2.msra.mxu0 0.0
  %267 = vmatprep.subr.mxu0 0.0
  %268 = vmatpush2.msra.mxu0 0.0
  %269 = vmatprep.subr.mxu0 0.0
  %270 = vmatpush2.msra.mxu0 0.0
  %271 = vmatprep.subr.mxu0 0.0
  %272 = vmatpush2.msra.mxu0 0.0
  %273 = vmatprep.subr.mxu0 0.0
  %274 = vmatpush2.msra.mxu0 0.0
  %275 = vmatprep.subr.mxu0 0.0
  %276 = vmatpush2.msra.mxu0 0.0
  %277 = vmatprep.subr.mxu0 0.0
  %278 = vmatpush2.msra.mxu0 0.0
  %279 = vmatprep.subr.mxu0 0.0
  %280 = vmatpush2.msra.mxu0 0.0
  %281 = vmatprep.subr.mxu0 0.0
  %282 = vmatpush2.msra.mxu0 0.0
  %283 = vmatprep.subr.mxu0 0.0
  %284 = vmatpush2.msra.mxu0 0.0
  %285 = vmatprep.subr.mxu0 0.0
  %286 = vmatpush2.msra.mxu0 0.0
  %287 = vmatprep.subr.mxu0 0.0
  %288 = vmatpush2.msra.mxu0 0.0
  %289 = vmatprep.subr.mxu0 0.0
  %290 = vmatpush2.msra.mxu0 0.0
  %291 = vmatprep.subr.mxu0 0.0
  %292 = vmatpush2.msra.mxu0 0.0
  %293 = vmatprep.mubr.f32.mxu0 0.0
  %294 = vmatmul.mubr.f32.gmra.mxu0 %v227
  %v295 = vpop.f32.mrf.mxu0
  %v296 = vadd.f32 0.0, %v295
  %v297 = vpop.f32.mrf.mxu0
  %298 = vdwg.mxu0
  %v300 = vrot.slane %v296, 6
  %v302 = vadd.f32 %v119, %v300
  %v303 = vxor.u32 %v302, 2147483648
  %v304 = vmul.f32 %v303, 1.442695
  %v305 = vpow.pop %v304
  %v306 = vadd.f32 %v305, 1.0
  %v307 = vrcp.pop %v306
  %v308 = vmul.f32 1.0, %v307
  %v309 = vtanh.pop %v302
  %v311 = vrot.slane %v217, 6
  %v313 = vmul.f32 %v308, %v311
  %315 = vrot.lane.b32.xlu0 %v309, 96
  %v316 = vpop.permute.xlu0 %315
  %v318 = vmul.f32 %v308, %v316
  %320 = vrot.lane.b32.xlu0 %v318, 16
  %v321 = vpop.permute.xlu0 %320
  %v323 = vadd.f32 %v313, %v321
  %v324 = vtanh.pop %v323
  %326 = vrot.lane.b32.xlu0 %v324, 32
  %v327 = vpop.permute.xlu0 %326
  %v329 = vmul.f32 %v308, %v327
  %v331 = vrot.slane %v329, 2
  %332 = vrot.lane.b32.xlu0 %v331, 80
  %v333 = vpop.permute.xlu0 %332
  %v334 = vsel %vm48, %v333, 0
  %336 = vmatprep.subr.mxu0 0.0
  %337 = vmatpush1.msra.mxu0 0.0
  %338 = vmatprep.subr.mxu0 0.0
  %339 = vmatpush1.msra.mxu0 0.0
  %340 = vmatprep.subr.mxu0 0.0
  %341 = vmatpush1.msra.mxu0 0.0
  %342 = vmatprep.subr.mxu0 0.0
  %343 = vmatpush1.msra.mxu0 0.0
  %344 = vmatprep.subr.mxu0 0.0
  %345 = vmatpush1.msra.mxu0 0.0
  %346 = vmatprep.subr.mxu0 0.0
  %347 = vmatpush1.msra.mxu0 0.0
  %348 = vmatprep.subr.mxu0 0.0
  %349 = vmatpush1.msra.mxu0 0.0
  %350 = vmatprep.subr.mxu0 0.0
  %351 = vmatpush1.msra.mxu0 0.0
  %352 = vmatprep.subr.mxu0 0.0
  %353 = vmatpush1.msra.mxu0 0.0
  %354 = vmatprep.subr.mxu0 0.0
  %355 = vmatpush1.msra.mxu0 0.0
  %356 = vmatprep.subr.mxu0 0.0
  %357 = vmatpush1.msra.mxu0 0.0
  %358 = vmatprep.subr.mxu0 0.0
  %359 = vmatpush1.msra.mxu0 0.0
  %360 = vmatprep.subr.mxu0 0.0
  %361 = vmatpush1.msra.mxu0 0.0
  %362 = vmatprep.subr.mxu0 0.0
  %363 = vmatpush1.msra.mxu0 0.0
  %364 = vmatprep.subr.mxu0 0.0
  %365 = vmatpush1.msra.mxu0 %v22
  %366 = vmatprep.subr.mxu0 0.0
  %367 = vmatpush1.msra.mxu0 %v21
  %368 = vmatprep.subr.mxu0 0.0
  %369 = vmatpush2.msra.mxu0 0.0
  %370 = vmatprep.subr.mxu0 0.0
  %371 = vmatpush2.msra.mxu0 0.0
  %372 = vmatprep.subr.mxu0 0.0
  %373 = vmatpush2.msra.mxu0 0.0
  %374 = vmatprep.subr.mxu0 0.0
  %375 = vmatpush2.msra.mxu0 0.0
  %376 = vmatprep.subr.mxu0 0.0
  %377 = vmatpush2.msra.mxu0 0.0
  %378 = vmatprep.subr.mxu0 0.0
  %379 = vmatpush2.msra.mxu0 0.0
  %380 = vmatprep.subr.mxu0 0.0
  %381 = vmatpush2.msra.mxu0 0.0
  %382 = vmatprep.subr.mxu0 0.0
  %383 = vmatpush2.msra.mxu0 0.0
  %384 = vmatprep.subr.mxu0 0.0
  %385 = vmatpush2.msra.mxu0 0.0
  %386 = vmatprep.subr.mxu0 0.0
  %387 = vmatpush2.msra.mxu0 0.0
  %388 = vmatprep.subr.mxu0 0.0
  %389 = vmatpush2.msra.mxu0 0.0
  %390 = vmatprep.subr.mxu0 0.0
  %391 = vmatpush2.msra.mxu0 0.0
  %392 = vmatprep.subr.mxu0 0.0
  %393 = vmatpush2.msra.mxu0 0.0
  %394 = vmatprep.subr.mxu0 0.0
  %395 = vmatpush2.msra.mxu0 0.0
  %396 = vmatprep.subr.mxu0 0.0
  %397 = vmatpush2.msra.mxu0 0.0
  %398 = vmatprep.subr.mxu0 0.0
  %399 = vmatpush2.msra.mxu0 0.0
  %400 = vmatprep.mubr.f32.mxu0 0.0
  %401 = vmatmul.mubr.f32.gmra.mxu0 %v334
  %v402 = vpop.f32.mrf.mxu0
  %v403 = vadd.f32 0.0, %v402
  %v404 = vpop.f32.mrf.mxu0
  %405 = vdwg.mxu0
  %v407 = vrot.slane %v403, 4
  %v409 = vadd.f32 %v119, %v407
  %v410 = vxor.u32 %v409, 2147483648
  %v411 = vmul.f32 %v410, 1.442695
  %v412 = vpow.pop %v411
  %v413 = vadd.f32 %v412, 1.0
  %v414 = vrcp.pop %v413
  %v415 = vmul.f32 1.0, %v414
  %v416 = vtanh.pop %v409
  %v418 = vrot.slane %v323, 6
  %v420 = vmul.f32 %v415, %v418
  %422 = vrot.lane.b32.xlu0 %v416, 96
  %v423 = vpop.permute.xlu0 %422
  %v425 = vmul.f32 %v415, %v423
  %427 = vrot.lane.b32.xlu0 %v425, 16
  %v428 = vpop.permute.xlu0 %427
  %v430 = vadd.f32 %v420, %v428
  %v431 = vtanh.pop %v430
  %433 = vrot.lane.b32.xlu0 %v431, 32
  %v434 = vpop.permute.xlu0 %433
  %v436 = vmul.f32 %v415, %v434
  %v438 = vrot.slane %v436, 4
  %439 = vrot.lane.b32.xlu0 %v438, 80
  %v440 = vpop.permute.xlu0 %439
  %v441 = vsel %vm48, %v440, 0
  %443 = vmatprep.subr.mxu0 0.0
  %444 = vmatpush1.msra.mxu0 0.0
  %445 = vmatprep.subr.mxu0 0.0
  %446 = vmatpush1.msra.mxu0 0.0
  %447 = vmatprep.subr.mxu0 0.0
  %448 = vmatpush1.msra.mxu0 0.0
  %449 = vmatprep.subr.mxu0 0.0
  %450 = vmatpush1.msra.mxu0 0.0
  %451 = vmatprep.subr.mxu0 0.0
  %452 = vmatpush1.msra.mxu0 0.0
  %453 = vmatprep.subr.mxu0 0.0
  %454 = vmatpush1.msra.mxu0 0.0
  %455 = vmatprep.subr.mxu0 0.0
  %456 = vmatpush1.msra.mxu0 0.0
  %457 = vmatprep.subr.mxu0 0.0
  %458 = vmatpush1.msra.mxu0 0.0
  %459 = vmatprep.subr.mxu0 0.0
  %460 = vmatpush1.msra.mxu0 0.0
  %461 = vmatprep.subr.mxu0 0.0
  %462 = vmatpush1.msra.mxu0 0.0
  %463 = vmatprep.subr.mxu0 0.0
  %464 = vmatpush1.msra.mxu0 0.0
  %465 = vmatprep.subr.mxu0 0.0
  %466 = vmatpush1.msra.mxu0 0.0
  %467 = vmatprep.subr.mxu0 0.0
  %468 = vmatpush1.msra.mxu0 0.0
  %469 = vmatprep.subr.mxu0 0.0
  %470 = vmatpush1.msra.mxu0 0.0
  %471 = vmatprep.subr.mxu0 0.0
  %472 = vmatpush1.msra.mxu0 %v22
  %473 = vmatprep.subr.mxu0 0.0
  %474 = vmatpush1.msra.mxu0 %v21
  %475 = vmatprep.subr.mxu0 0.0
  %476 = vmatpush2.msra.mxu0 0.0
  %477 = vmatprep.subr.mxu0 0.0
  %478 = vmatpush2.msra.mxu0 0.0
  %479 = vmatprep.subr.mxu0 0.0
  %480 = vmatpush2.msra.mxu0 0.0
  %481 = vmatprep.subr.mxu0 0.0
  %482 = vmatpush2.msra.mxu0 0.0
  %483 = vmatprep.subr.mxu0 0.0
  %484 = vmatpush2.msra.mxu0 0.0
  %485 = vmatprep.subr.mxu0 0.0
  %486 = vmatpush2.msra.mxu0 0.0
  %487 = vmatprep.subr.mxu0 0.0
  %488 = vmatpush2.msra.mxu0 0.0
  %489 = vmatprep.subr.mxu0 0.0
  %490 = vmatpush2.msra.mxu0 0.0
  %491 = vmatprep.subr.mxu0 0.0
  %492 = vmatpush2.msra.mxu0 0.0
  %493 = vmatprep.subr.mxu0 0.0
  %494 = vmatpush2.msra.mxu0 0.0
  %495 = vmatprep.subr.mxu0 0.0
  %496 = vmatpush2.msra.mxu0 0.0
  %497 = vmatprep.subr.mxu0 0.0
  %498 = vmatpush2.msra.mxu0 0.0
  %499 = vmatprep.subr.mxu0 0.0
  %500 = vmatpush2.msra.mxu0 0.0
  %501 = vmatprep.subr.mxu0 0.0
  %502 = vmatpush2.msra.mxu0 0.0
  %503 = vmatprep.subr.mxu0 0.0
  %504 = vmatpush2.msra.mxu0 0.0
  %505 = vmatprep.subr.mxu0 0.0
  %506 = vmatpush2.msra.mxu0 0.0
  %507 = vmatprep.mubr.f32.mxu0 0.0
  %508 = vmatmul.mubr.f32.gmra.mxu0 %v441
  %v509 = vpop.f32.mrf.mxu0
  %v510 = vadd.f32 0.0, %v509
  %v511 = vpop.f32.mrf.mxu0
  %512 = vdwg.mxu0
  %v514 = vrot.slane %v510, 2
  %v516 = vadd.f32 %v119, %v514
  %v517 = vxor.u32 %v516, 2147483648
  %v518 = vmul.f32 %v517, 1.442695
  %v519 = vpow.pop %v518
  %v520 = vadd.f32 %v519, 1.0
  %v521 = vrcp.pop %v520
  %v522 = vmul.f32 1.0, %v521
  %v523 = vtanh.pop %v516
  %v525 = vrot.slane %v430, 6
  %v527 = vmul.f32 %v522, %v525
  %529 = vrot.lane.b32.xlu0 %v523, 96
  %v530 = vpop.permute.xlu0 %529
  %v532 = vmul.f32 %v522, %v530
  %534 = vrot.lane.b32.xlu0 %v532, 16
  %v535 = vpop.permute.xlu0 %534
  %v537 = vadd.f32 %v527, %v535
  %v538 = vtanh.pop %v537
  %540 = vrot.lane.b32.xlu0 %v538, 32
  %v541 = vpop.permute.xlu0 %540
  %v543 = vmul.f32 %v522, %v541
  %vm544 = vcmask 1041408
  %v545 = vsel %vm544, %v223, %v329
  %vm546 = vcmask 1043456
  %v547 = vsel %vm546, %v545, %v436
  %vm548 = vcmask 1045504
  %v549 = vsel %vm548, %v547, %v543
  %551 = vrot.lane.b32.xlu0 %v549, 80
  %v552 = vpop.permute.xlu0 %551
  %v553 = vsel %vm48, %v552, 0
  %555 = vmatprep.subr.mxu0 0.0
  %556 = vmatpush1.msra.mxu0 0.0
  %557 = vmatprep.subr.mxu0 0.0
  %558 = vmatpush1.msra.mxu0 0.0
  %559 = vmatprep.subr.mxu0 0.0
  %560 = vmatpush1.msra.mxu0 0.0
  %561 = vmatprep.subr.mxu0 0.0
  %562 = vmatpush1.msra.mxu0 0.0
  %563 = vmatprep.subr.mxu0 0.0
  %564 = vmatpush1.msra.mxu0 0.0
  %565 = vmatprep.subr.mxu0 0.0
  %566 = vmatpush1.msra.mxu0 0.0
  %567 = vmatprep.subr.mxu0 0.0
  %568 = vmatpush1.msra.mxu0 0.0
  %569 = vmatprep.subr.mxu0 0.0
  %570 = vmatpush1.msra.mxu0 0.0
  %571 = vmatprep.subr.mxu0 0.0
  %572 = vmatpush1.msra.mxu0 0.0
  %573 = vmatprep.subr.mxu0 0.0
  %574 = vmatpush1.msra.mxu0 0.0
  %575 = vmatprep.subr.mxu0 0.0
  %576 = vmatpush1.msra.mxu0 0.0
  %577 = vmatprep.subr.mxu0 0.0
  %578 = vmatpush1.msra.mxu0 0.0
  %579 = vmatprep.subr.mxu0 0.0
  %580 = vmatpush1.msra.mxu0 0.0
  %581 = vmatprep.subr.mxu0 0.0
  %582 = vmatpush1.msra.mxu0 0.0
  %583 = vmatprep.subr.mxu0 0.0
  %584 = vmatpush1.msra.mxu0 %v25
  %585 = vmatprep.subr.mxu0 0.0
  %586 = vmatpush1.msra.mxu0 %v24
  %587 = vmatprep.subr.mxu0 0.0
  %588 = vmatpush2.msra.mxu0 0.0
  %589 = vmatprep.subr.mxu0 0.0
  %590 = vmatpush2.msra.mxu0 0.0
  %591 = vmatprep.subr.mxu0 0.0
  %592 = vmatpush2.msra.mxu0 0.0
  %593 = vmatprep.subr.mxu0 0.0
  %594 = vmatpush2.msra.mxu0 0.0
  %595 = vmatprep.subr.mxu0 0.0
  %596 = vmatpush2.msra.mxu0 0.0
  %597 = vmatprep.subr.mxu0 0.0
  %598 = vmatpush2.msra.mxu0 0.0
  %599 = vmatprep.subr.mxu0 0.0
  %600 = vmatpush2.msra.mxu0 0.0
  %601 = vmatprep.subr.mxu0 0.0
  %602 = vmatpush2.msra.mxu0 0.0
  %603 = vmatprep.subr.mxu0 0.0
  %604 = vmatpush2.msra.mxu0 0.0
  %605 = vmatprep.subr.mxu0 0.0
  %606 = vmatpush2.msra.mxu0 0.0
  %607 = vmatprep.subr.mxu0 0.0
  %608 = vmatpush2.msra.mxu0 0.0
  %609 = vmatprep.subr.mxu0 0.0
  %610 = vmatpush2.msra.mxu0 0.0
  %611 = vmatprep.subr.mxu0 0.0
  %612 = vmatpush2.msra.mxu0 0.0
  %613 = vmatprep.subr.mxu0 0.0
  %614 = vmatpush2.msra.mxu0 0.0
  %615 = vmatprep.subr.mxu0 0.0
  %616 = vmatpush2.msra.mxu0 0.0
  %617 = vmatprep.subr.mxu0 0.0
  %618 = vmatpush2.msra.mxu0 0.0
  %619 = vmatprep.mubr.f32.mxu0 0.0
  %620 = vmatmul.mubr.f32.gmra.mxu0 %v553
  %v621 = vpop.f32.mrf.mxu0
  %v622 = vadd.f32 0.0, %v621
  %v623 = vpop.f32.mrf.mxu0
  %624 = vdwg.mxu0
  %v626 = vsel %vm48, %v26, 0
  %v629 = vsel %vm48, %v27, 0
  %631 = vmatprep.subr.mxu0 0.0
  %632 = vmatpush1.msra.mxu0 0.0
  %633 = vmatprep.subr.mxu0 0.0
  %634 = vmatpush1.msra.mxu0 0.0
  %635 = vmatprep.subr.mxu0 0.0
  %636 = vmatpush1.msra.mxu0 0.0
  %637 = vmatprep.subr.mxu0 0.0
  %638 = vmatpush1.msra.mxu0 0.0
  %639 = vmatprep.subr.mxu0 0.0
  %640 = vmatpush1.msra.mxu0 0.0
  %641 = vmatprep.subr.mxu0 0.0
  %642 = vmatpush1.msra.mxu0 0.0
  %643 = vmatprep.subr.mxu0 0.0
  %644 = vmatpush1.msra.mxu0 0.0
  %645 = vmatprep.subr.mxu0 0.0
  %646 = vmatpush1.msra.mxu0 0.0
  %647 = vmatprep.subr.mxu0 0.0
  %648 = vmatpush1.msra.mxu0 0.0
  %649 = vmatprep.subr.mxu0 0.0
  %650 = vmatpush1.msra.mxu0 0.0
  %651 = vmatprep.subr.mxu0 0.0
  %652 = vmatpush1.msra.mxu0 0.0
  %653 = vmatprep.subr.mxu0 0.0
  %654 = vmatpush1.msra.mxu0 0.0
  %655 = vmatprep.subr.mxu0 0.0
  %656 = vmatpush1.msra.mxu0 0.0
  %657 = vmatprep.subr.mxu0 0.0
  %658 = vmatpush1.msra.mxu0 0.0
  %659 = vmatprep.subr.mxu0 0.0
  %660 = vmatpush1.msra.mxu0 %v15
  %661 = vmatprep.subr.mxu0 0.0
  %662 = vmatpush1.msra.mxu0 %v14
  %663 = vmatprep.subr.mxu0 0.0
  %664 = vmatpush2.msra.mxu0 0.0
  %665 = vmatprep.subr.mxu0 0.0
  %666 = vmatpush2.msra.mxu0 0.0
  %667 = vmatprep.subr.mxu0 0.0
  %668 = vmatpush2.msra.mxu0 0.0
  %669 = vmatprep.subr.mxu0 0.0
  %670 = vmatpush2.msra.mxu0 0.0
  %671 = vmatprep.subr.mxu0 0.0
  %672 = vmatpush2.msra.mxu0 0.0
  %673 = vmatprep.subr.mxu0 0.0
  %674 = vmatpush2.msra.mxu0 0.0
  %675 = vmatprep.subr.mxu0 0.0
  %676 = vmatpush2.msra.mxu0 0.0
  %677 = vmatprep.subr.mxu0 0.0
  %678 = vmatpush2.msra.mxu0 0.0
  %679 = vmatprep.subr.mxu0 0.0
  %680 = vmatpush2.msra.mxu0 0.0
  %681 = vmatprep.subr.mxu0 0.0
  %682 = vmatpush2.msra.mxu0 0.0
  %683 = vmatprep.subr.mxu0 0.0
  %684 = vmatpush2.msra.mxu0 0.0
  %685 = vmatprep.subr.mxu0 0.0
  %686 = vmatpush2.msra.mxu0 0.0
  %687 = vmatprep.subr.mxu0 0.0
  %688 = vmatpush2.msra.mxu0 0.0
  %689 = vmatprep.subr.mxu0 0.0
  %690 = vmatpush2.msra.mxu0 0.0
  %691 = vmatprep.subr.mxu0 0.0
  %692 = vmatpush2.msra.mxu0 0.0
  %693 = vmatprep.subr.mxu0 0.0
  %694 = vmatpush2.msra.mxu0 0.0
  %695 = vmatprep.mubr.f32.mxu0 0.0
  %696 = vmatmul.mubr.f32.gmra.mxu0 %v626
  %v697 = vpop.f32.mrf.mxu0
  %v698 = vadd.f32 0.0, %v697
  %v699 = vpop.f32.mrf.mxu0
  %700 = vmatprep.mubr.f32.mxu0 0.0
  %701 = vmatmul.mubr.f32.gmra.mxu0 %v629
  %v702 = vpop.f32.mrf.mxu0
  %v703 = vadd.f32 0.0, %v702
  %v704 = vpop.f32.mrf.mxu0
  %705 = vdwg.mxu0
  %v707 = vsel %vm48, %v12, 0
  %v710 = vsel %vm48, %v13, 0
  %712 = vmatprep.subr.mxu0 0.0
  %713 = vmatpush1.msra.mxu0 0.0
  %714 = vmatprep.subr.mxu0 0.0
  %715 = vmatpush1.msra.mxu0 0.0
  %716 = vmatprep.subr.mxu0 0.0
  %717 = vmatpush1.msra.mxu0 0.0
  %718 = vmatprep.subr.mxu0 0.0
  %719 = vmatpush1.msra.mxu0 0.0
  %720 = vmatprep.subr.mxu0 0.0
  %721 = vmatpush1.msra.mxu0 0.0
  %722 = vmatprep.subr.mxu0 0.0
  %723 = vmatpush1.msra.mxu0 0.0
  %724 = vmatprep.subr.mxu0 0.0
  %725 = vmatpush1.msra.mxu0 0.0
  %726 = vmatprep.subr.mxu0 0.0
  %727 = vmatpush1.msra.mxu0 0.0
  %728 = vmatprep.subr.mxu0 0.0
  %729 = vmatpush1.msra.mxu0 0.0
  %730 = vmatprep.subr.mxu0 0.0
  %731 = vmatpush1.msra.mxu0 0.0
  %732 = vmatprep.subr.mxu0 0.0
  %733 = vmatpush1.msra.mxu0 0.0
  %734 = vmatprep.subr.mxu0 0.0
  %735 = vmatpush1.msra.mxu0 0.0
  %736 = vmatprep.subr.mxu0 0.0
  %737 = vmatpush1.msra.mxu0 0.0
  %738 = vmatprep.subr.mxu0 0.0
  %739 = vmatpush1.msra.mxu0 0.0
  %740 = vmatprep.subr.mxu0 0.0
  %741 = vmatpush1.msra.mxu0 %v29
  %742 = vmatprep.subr.mxu0 0.0
  %743 = vmatpush1.msra.mxu0 %v28
  %744 = vmatprep.subr.mxu0 0.0
  %745 = vmatpush2.msra.mxu0 0.0
  %746 = vmatprep.subr.mxu0 0.0
  %747 = vmatpush2.msra.mxu0 0.0
  %748 = vmatprep.subr.mxu0 0.0
  %749 = vmatpush2.msra.mxu0 0.0
  %750 = vmatprep.subr.mxu0 0.0
  %751 = vmatpush2.msra.mxu0 0.0
  %752 = vmatprep.subr.mxu0 0.0
  %753 = vmatpush2.msra.mxu0 0.0
  %754 = vmatprep.subr.mxu0 0.0
  %755 = vmatpush2.msra.mxu0 0.0
  %756 = vmatprep.subr.mxu0 0.0
  %757 = vmatpush2.msra.mxu0 0.0
  %758 = vmatprep.subr.mxu0 0.0
  %759 = vmatpush2.msra.mxu0 0.0
  %760 = vmatprep.subr.mxu0 0.0
  %761 = vmatpush2.msra.mxu0 0.0
  %762 = vmatprep.subr.mxu0 0.0
  %763 = vmatpush2.msra.mxu0 0.0
  %764 = vmatprep.subr.mxu0 0.0
  %765 = vmatpush2.msra.mxu0 0.0
  %766 = vmatprep.subr.mxu0 0.0
  %767 = vmatpush2.msra.mxu0 0.0
  %768 = vmatprep.subr.mxu0 0.0
  %769 = vmatpush2.msra.mxu0 0.0
  %770 = vmatprep.subr.mxu0 0.0
  %771 = vmatpush2.msra.mxu0 0.0
  %772 = vmatprep.subr.mxu0 0.0
  %773 = vmatpush2.msra.mxu0 0.0
  %774 = vmatprep.subr.mxu0 0.0
  %775 = vmatpush2.msra.mxu0 0.0
  %776 = vmatprep.mubr.f32.mxu0 0.0
  %777 = vmatmul.mubr.f32.gmra.mxu0 %v707
  %v778 = vpop.f32.mrf.mxu0
  %v779 = vadd.f32 0.0, %v778
  %v780 = vpop.f32.mrf.mxu0
  %781 = vmatprep.mubr.f32.mxu0 0.0
  %782 = vmatmul.mubr.f32.gmra.mxu0 %v710
  %v783 = vpop.f32.mrf.mxu0
  %v784 = vadd.f32 0.0, %v783
  %v785 = vpop.f32.mrf.mxu0
  %786 = vdwg.mxu0
  %vm787 = vcmask 64512
  %v789 = vsel %vm787, %v622, 0
  %791 = vmatprep.subr.mxu0 0.0
  %792 = vmatpush1.msra.mxu0 0.0
  %793 = vmatprep.subr.mxu0 0.0
  %794 = vmatpush1.msra.mxu0 0.0
  %795 = vmatprep.subr.mxu0 0.0
  %796 = vmatpush1.msra.mxu0 0.0
  %797 = vmatprep.subr.mxu0 0.0
  %798 = vmatpush1.msra.mxu0 0.0
  %799 = vmatprep.subr.mxu0 0.0
  %800 = vmatpush1.msra.mxu0 0.0
  %801 = vmatprep.subr.mxu0 0.0
  %802 = vmatpush1.msra.mxu0 0.0
  %803 = vmatprep.subr.mxu0 0.0
  %804 = vmatpush1.msra.mxu0 0.0
  %805 = vmatprep.subr.mxu0 0.0
  %806 = vmatpush1.msra.mxu0 0.0
  %807 = vmatprep.subr.mxu0 0.0
  %808 = vmatpush1.msra.mxu0 0.0
  %809 = vmatprep.subr.mxu0 0.0
  %810 = vmatpush1.msra.mxu0 0.0
  %811 = vmatprep.subr.mxu0 0.0
  %812 = vmatpush1.msra.mxu0 0.0
  %813 = vmatprep.subr.mxu0 0.0
  %814 = vmatpush1.msra.mxu0 0.0
  %815 = vmatprep.subr.mxu0 0.0
  %816 = vmatpush1.msra.mxu0 0.0
  %817 = vmatprep.subr.mxu0 0.0
  %818 = vmatpush1.msra.mxu0 0.0
  %819 = vmatprep.subr.mxu0 0.0
  %820 = vmatpush1.msra.mxu0 0.0
  %821 = vmatprep.subr.mxu0 0.0
  %822 = vmatpush1.msra.mxu0 %v698
  %823 = vmatprep.subr.mxu0 0.0
  %824 = vmatpush2.msra.mxu0 0.0
  %825 = vmatprep.subr.mxu0 0.0
  %826 = vmatpush2.msra.mxu0 0.0
  %827 = vmatprep.subr.mxu0 0.0
  %828 = vmatpush2.msra.mxu0 0.0
  %829 = vmatprep.subr.mxu0 0.0
  %830 = vmatpush2.msra.mxu0 0.0
  %831 = vmatprep.subr.mxu0 0.0
  %832 = vmatpush2.msra.mxu0 0.0
  %833 = vmatprep.subr.mxu0 0.0
  %834 = vmatpush2.msra.mxu0 0.0
  %835 = vmatprep.subr.mxu0 0.0
  %836 = vmatpush2.msra.mxu0 0.0
  %837 = vmatprep.subr.mxu0 0.0
  %838 = vmatpush2.msra.mxu0 0.0
  %839 = vmatprep.subr.mxu0 0.0
  %840 = vmatpush2.msra.mxu0 0.0
  %841 = vmatprep.subr.mxu0 0.0
  %842 = vmatpush2.msra.mxu0 0.0
  %843 = vmatprep.subr.mxu0 0.0
  %844 = vmatpush2.msra.mxu0 0.0
  %845 = vmatprep.subr.mxu0 0.0
  %846 = vmatpush2.msra.mxu0 0.0
  %847 = vmatprep.subr.mxu0 0.0
  %848 = vmatpush2.msra.mxu0 0.0
  %849 = vmatprep.subr.mxu0 0.0
  %850 = vmatpush2.msra.mxu0 0.0
  %851 = vmatprep.subr.mxu0 0.0
  %852 = vmatpush2.msra.mxu0 0.0
  %853 = vmatprep.subr.mxu0 0.0
  %854 = vmatpush2.msra.mxu0 0.0
  %855 = vmatprep.mubr.f32.mxu0 0.0
  %856 = vmatmul.mubr.f32.gmra.mxu0 %v789
  %v857 = vpop.f32.mrf.mxu0
  %v858 = vadd.f32 %v18, %v857
  %v859 = vpop.f32.mrf.mxu0
  %860 = vdwg.mxu0
  %vm861 = vcmask 97280
  %v862 = vsel %vm861, %v858, -inf
  %863 = vmax.xlane.f32.xlu0 %v862
  %v864 = vpop.xlane.xlu0 %863
  %v865 = vsub.f32 %v858, %v864
  %v866 = vmul.f32 %v865, 1.442695
  %v867 = vpow.pop %v866
  %v868 = vsel %vm861, %v867, 0.0
  %869 = vadd.xlane.f32.xlu0 %v868
  %v870 = vpop.xlane.xlu0 %869
  %v871 = vrcp.pop %v870
  %v872 = vmul.f32 %v867, %v871
  %v874 = vsel %vm861, %v872, 0
  %v877 = vsel %vm546, %v784, 0
  %879 = vmatprep.subr.mxu0 0.0
  %880 = vmatpush1.msra.mxu0 0.0
  %881 = vmatprep.subr.mxu0 0.0
  %882 = vmatpush1.msra.mxu0 0.0
  %883 = vmatprep.subr.mxu0 0.0
  %884 = vmatpush1.msra.mxu0 0.0
  %885 = vmatprep.subr.mxu0 0.0
  %886 = vmatpush1.msra.mxu0 0.0
  %887 = vmatprep.subr.mxu0 0.0
  %888 = vmatpush1.msra.mxu0 0.0
  %889 = vmatprep.subr.mxu0 0.0
  %890 = vmatpush1.msra.mxu0 0.0
  %891 = vmatprep.subr.mxu0 0.0
  %892 = vmatpush1.msra.mxu0 0.0
  %893 = vmatprep.subr.mxu0 0.0
  %894 = vmatpush1.msra.mxu0 0.0
  %895 = vmatprep.subr.mxu0 0.0
  %896 = vmatpush1.msra.mxu0 0.0
  %897 = vmatprep.subr.mxu0 0.0
  %898 = vmatpush1.msra.mxu0 0.0
  %899 = vmatprep.subr.mxu0 0.0
  %900 = vmatpush1.msra.mxu0 0.0
  %901 = vmatprep.subr.mxu0 0.0
  %902 = vmatpush1.msra.mxu0 0.0
  %903 = vmatprep.subr.mxu0 0.0
  %904 = vmatpush1.msra.mxu0 0.0
  %905 = vmatprep.subr.mxu0 0.0
  %906 = vmatpush1.msra.mxu0 0.0
  %907 = vmatprep.subr.mxu0 0.0
  %908 = vmatpush1.msra.mxu0 %v877
  %909 = vmatprep.subr.mxu0 0.0
  %910 = vmatpush1.msra.mxu0 %v779
  %911 = vmatprep.subr.mxu0 0.0
  %912 = vmatpush2.msra.mxu0 0.0
  %913 = vmatprep.subr.mxu0 0.0
  %914 = vmatpush2.msra.mxu0 0.0
  %915 = vmatprep.subr.mxu0 0.0
  %916 = vmatpush2.msra.mxu0 0.0
  %917 = vmatprep.subr.mxu0 0.0
  %918 = vmatpush2.msra.mxu0 0.0
  %919 = vmatprep.subr.mxu0 0.0
  %920 = vmatpush2.msra.mxu0 0.0
  %921 = vmatprep.subr.mxu0 0.0
  %922 = vmatpush2.msra.mxu0 0.0
  %923 = vmatprep.subr.mxu0 0.0
  %924 = vmatpush2.msra.mxu0 0.0
  %925 = vmatprep.subr.mxu0 0.0
  %926 = vmatpush2.msra.mxu0 0.0
  %927 = vmatprep.subr.mxu0 0.0
  %928 = vmatpush2.msra.mxu0 0.0
  %929 = vmatprep.subr.mxu0 0.0
  %930 = vmatpush2.msra.mxu0 0.0
  %931 = vmatprep.subr.mxu0 0.0
  %932 = vmatpush2.msra.mxu0 0.0
  %933 = vmatprep.subr.mxu0 0.0
  %934 = vmatpush2.msra.mxu0 0.0
  %935 = vmatprep.subr.mxu0 0.0
  %936 = vmatpush2.msra.mxu0 0.0
  %937 = vmatprep.subr.mxu0 0.0
  %938 = vmatpush2.msra.mxu0 0.0
  %939 = vmatprep.subr.mxu0 0.0
  %940 = vmatpush2.msra.mxu0 0.0
  %941 = vmatprep.subr.mxu0 0.0
  %942 = vmatpush2.msra.mxu0 0.0
  %943 = vmatprep.mubr.f32.mxu0 0.0
  %944 = vmatmul.mubr.f32.gmra.mxu0 %v874
  %v945 = vpop.f32.mrf.mxu0
  %v946 = vadd.f32 0.0, %v945
  %v947 = vpop.f32.mrf.mxu0
  %948 = vdwg.mxu0
  %949 = vrot.lane.b32.xlu0 %v622, 120
  %v950 = vpop.permute.xlu0 %949
  %v951 = vsel %vm787, %v950, 0
  %953 = vmatprep.subr.mxu0 0.0
  %954 = vmatpush1.msra.mxu0 0.0
  %955 = vmatprep.subr.mxu0 0.0
  %956 = vmatpush1.msra.mxu0 0.0
  %957 = vmatprep.subr.mxu0 0.0
  %958 = vmatpush1.msra.mxu0 0.0
  %959 = vmatprep.subr.mxu0 0.0
  %960 = vmatpush1.msra.mxu0 0.0
  %961 = vmatprep.subr.mxu0 0.0
  %962 = vmatpush1.msra.mxu0 0.0
  %963 = vmatprep.subr.mxu0 0.0
  %964 = vmatpush1.msra.mxu0 0.0
  %965 = vmatprep.subr.mxu0 0.0
  %966 = vmatpush1.msra.mxu0 0.0
  %967 = vmatprep.subr.mxu0 0.0
  %968 = vmatpush1.msra.mxu0 0.0
  %969 = vmatprep.subr.mxu0 0.0
  %970 = vmatpush1.msra.mxu0 0.0
  %971 = vmatprep.subr.mxu0 0.0
  %972 = vmatpush1.msra.mxu0 0.0
  %973 = vmatprep.subr.mxu0 0.0
  %974 = vmatpush1.msra.mxu0 0.0
  %975 = vmatprep.subr.mxu0 0.0
  %976 = vmatpush1.msra.mxu0 0.0
  %977 = vmatprep.subr.mxu0 0.0
  %978 = vmatpush1.msra.mxu0 0.0
  %979 = vmatprep.subr.mxu0 0.0
  %980 = vmatpush1.msra.mxu0 0.0
  %981 = vmatprep.subr.mxu0 0.0
  %982 = vmatpush1.msra.mxu0 0.0
  %983 = vmatprep.subr.mxu0 0.0
  %984 = vmatpush1.msra.mxu0 %v703
  %985 = vmatprep.subr.mxu0 0.0
  %986 = vmatpush2.msra.mxu0 0.0
  %987 = vmatprep.subr.mxu0 0.0
  %988 = vmatpush2.msra.mxu0 0.0
  %989 = vmatprep.subr.mxu0 0.0
  %990 = vmatpush2.msra.mxu0 0.0
  %991 = vmatprep.subr.mxu0 0.0
  %992 = vmatpush2.msra.mxu0 0.0
  %993 = vmatprep.subr.mxu0 0.0
  %994 = vmatpush2.msra.mxu0 0.0
  %995 = vmatprep.subr.mxu0 0.0
  %996 = vmatpush2.msra.mxu0 0.0
  %997 = vmatprep.subr.mxu0 0.0
  %998 = vmatpush2.msra.mxu0 0.0
  %999 = vmatprep.subr.mxu0 0.0
  %1000 = vmatpush2.msra.mxu0 0.0
  %1001 = vmatprep.subr.mxu0 0.0
  %1002 = vmatpush2.msra.mxu0 0.0
  %1003 = vmatprep.subr.mxu0 0.0
  %1004 = vmatpush2.msra.mxu0 0.0
  %1005 = vmatprep.subr.mxu0 0.0
  %1006 = vmatpush2.msra.mxu0 0.0
  %1007 = vmatprep.subr.mxu0 0.0
  %1008 = vmatpush2.msra.mxu0 0.0
  %1009 = vmatprep.subr.mxu0 0.0
  %1010 = vmatpush2.msra.mxu0 0.0
  %1011 = vmatprep.subr.mxu0 0.0
  %1012 = vmatpush2.msra.mxu0 0.0
  %1013 = vmatprep.subr.mxu0 0.0
  %1014 = vmatpush2.msra.mxu0 0.0
  %1015 = vmatprep.subr.mxu0 0.0
  %1016 = vmatpush2.msra.mxu0 0.0
  %1017 = vmatprep.mubr.f32.mxu0 0.0
  %1018 = vmatmul.mubr.f32.gmra.mxu0 %v951
  %v1019 = vpop.f32.mrf.mxu0
  %v1020 = vadd.f32 %v18, %v1019
  %v1021 = vpop.f32.mrf.mxu0
  %1022 = vdwg.mxu0
  %v1023 = vsel %vm861, %v1020, -inf
  %1024 = vmax.xlane.f32.xlu0 %v1023
  %v1025 = vpop.xlane.xlu0 %1024
  %v1026 = vsub.f32 %v1020, %v1025
  %v1027 = vmul.f32 %v1026, 1.442695
  %v1028 = vpow.pop %v1027
  %v1029 = vsel %vm861, %v1028, 0.0
  %1030 = vadd.xlane.f32.xlu0 %v1029
  %v1031 = vpop.xlane.xlu0 %1030
  %v1032 = vrcp.pop %v1031
  %v1033 = vmul.f32 %v1028, %v1032
  %1035 = vrot.lane.b32.xlu0 %v779, 120
  %v1036 = vpop.permute.xlu0 %1035
  %1037 = vrot.lane.b32.xlu0 %v784, 120
  %v1038 = vpop.permute.xlu0 %1037
  %v1041 = vsel %vm861, %v1033, 0
  %v1043 = vsel %vm546, %v1038, 0
  %1045 = vmatprep.subr.mxu0 0.0
  %1046 = vmatpush1.msra.mxu0 0.0
  %1047 = vmatprep.subr.mxu0 0.0
  %1048 = vmatpush1.msra.mxu0 0.0
  %1049 = vmatprep.subr.mxu0 0.0
  %1050 = vmatpush1.msra.mxu0 0.0
  %1051 = vmatprep.subr.mxu0 0.0
  %1052 = vmatpush1.msra.mxu0 0.0
  %1053 = vmatprep.subr.mxu0 0.0
  %1054 = vmatpush1.msra.mxu0 0.0
  %1055 = vmatprep.subr.mxu0 0.0
  %1056 = vmatpush1.msra.mxu0 0.0
  %1057 = vmatprep.subr.mxu0 0.0
  %1058 = vmatpush1.msra.mxu0 0.0
  %1059 = vmatprep.subr.mxu0 0.0
  %1060 = vmatpush1.msra.mxu0 0.0
  %1061 = vmatprep.subr.mxu0 0.0
  %1062 = vmatpush1.msra.mxu0 0.0
  %1063 = vmatprep.subr.mxu0 0.0
  %1064 = vmatpush1.msra.mxu0 0.0
  %1065 = vmatprep.subr.mxu0 0.0
  %1066 = vmatpush1.msra.mxu0 0.0
  %1067 = vmatprep.subr.mxu0 0.0
  %1068 = vmatpush1.msra.mxu0 0.0
  %1069 = vmatprep.subr.mxu0 0.0
  %1070 = vmatpush1.msra.mxu0 0.0
  %1071 = vmatprep.subr.mxu0 0.0
  %1072 = vmatpush1.msra.mxu0 0.0
  %1073 = vmatprep.subr.mxu0 0.0
  %1074 = vmatpush1.msra.mxu0 %v1043
  %1075 = vmatprep.subr.mxu0 0.0
  %1076 = vmatpush1.msra.mxu0 %v1036
  %1077 = vmatprep.subr.mxu0 0.0
  %1078 = vmatpush2.msra.mxu0 0.0
  %1079 = vmatprep.subr.mxu0 0.0
  %1080 = vmatpush2.msra.mxu0 0.0
  %1081 = vmatprep.subr.mxu0 0.0
  %1082 = vmatpush2.msra.mxu0 0.0
  %1083 = vmatprep.subr.mxu0 0.0
  %1084 = vmatpush2.msra.mxu0 0.0
  %1085 = vmatprep.subr.mxu0 0.0
  %1086 = vmatpush2.msra.mxu0 0.0
  %1087 = vmatprep.subr.mxu0 0.0
  %1088 = vmatpush2.msra.mxu0 0.0
  %1089 = vmatprep.subr.mxu0 0.0
  %1090 = vmatpush2.msra.mxu0 0.0
  %1091 = vmatprep.subr.mxu0 0.0
  %1092 = vmatpush2.msra.mxu0 0.0
  %1093 = vmatprep.subr.mxu0 0.0
  %1094 = vmatpush2.msra.mxu0 0.0
  %1095 = vmatprep.subr.mxu0 0.0
  %1096 = vmatpush2.msra.mxu0 0.0
  %1097 = vmatprep.subr.mxu0 0.0
  %1098 = vmatpush2.msra.mxu0 0.0
  %1099 = vmatprep.subr.mxu0 0.0
  %1100 = vmatpush2.msra.mxu0 0.0
  %1101 = vmatprep.subr.mxu0 0.0
  %1102 = vmatpush2.msra.mxu0 0.0
  %1103 = vmatprep.subr.mxu0 0.0
  %1104 = vmatpush2.msra.mxu0 0.0
  %1105 = vmatprep.subr.mxu0 0.0
  %1106 = vmatpush2.msra.mxu0 0.0
  %1107 = vmatprep.subr.mxu0 0.0
  %1108 = vmatpush2.msra.mxu0 0.0
  %1109 = vmatprep.mubr.f32.mxu0 0.0
  %1110 = vmatmul.mubr.f32.gmra.mxu0 %v1041
  %v1111 = vpop.f32.mrf.mxu0
  %v1112 = vadd.f32 0.0, %v1111
  %v1113 = vpop.f32.mrf.mxu0
  %1114 = vdwg.mxu0
  %1116 = vrot.lane.b32.xlu0 %v1112, 8
  %v1117 = vpop.permute.xlu0 %1116
  %v1119 = vsel %vm787, %v946, %v1117
  %v1121 = vsel %vm48, %v1119, 0
  %1123 = vmatprep.subr.mxu0 0.0
  %1124 = vmatpush1.msra.mxu0 0.0
  %1125 = vmatprep.subr.mxu0 0.0
  %1126 = vmatpush1.msra.mxu0 0.0
  %1127 = vmatprep.subr.mxu0 0.0
  %1128 = vmatpush1.msra.mxu0 0.0
  %1129 = vmatprep.subr.mxu0 0.0
  %1130 = vmatpush1.msra.mxu0 0.0
  %1131 = vmatprep.subr.mxu0 0.0
  %1132 = vmatpush1.msra.mxu0 0.0
  %1133 = vmatprep.subr.mxu0 0.0
  %1134 = vmatpush1.msra.mxu0 0.0
  %1135 = vmatprep.subr.mxu0 0.0
  %1136 = vmatpush1.msra.mxu0 0.0
  %1137 = vmatprep.subr.mxu0 0.0
  %1138 = vmatpush1.msra.mxu0 0.0
  %1139 = vmatprep.subr.mxu0 0.0
  %1140 = vmatpush1.msra.mxu0 0.0
  %1141 = vmatprep.subr.mxu0 0.0
  %1142 = vmatpush1.msra.mxu0 0.0
  %1143 = vmatprep.subr.mxu0 0.0
  %1144 = vmatpush1.msra.mxu0 0.0
  %1145 = vmatprep.subr.mxu0 0.0
  %1146 = vmatpush1.msra.mxu0 0.0
  %1147 = vmatprep.subr.mxu0 0.0
  %1148 = vmatpush1.msra.mxu0 0.0
  %1149 = vmatprep.subr.mxu0 0.0
  %1150 = vmatpush1.msra.mxu0 0.0
  %1151 = vmatprep.subr.mxu0 0.0
  %1152 = vmatpush1.msra.mxu0 %v31
  %1153 = vmatprep.subr.mxu0 0.0
  %1154 = vmatpush1.msra.mxu0 %v30
  %1155 = vmatprep.subr.mxu0 0.0
  %1156 = vmatpush2.msra.mxu0 0.0
  %1157 = vmatprep.subr.mxu0 0.0
  %1158 = vmatpush2.msra.mxu0 0.0
  %1159 = vmatprep.subr.mxu0 0.0
  %1160 = vmatpush2.msra.mxu0 0.0
  %1161 = vmatprep.subr.mxu0 0.0
  %1162 = vmatpush2.msra.mxu0 0.0
  %1163 = vmatprep.subr.mxu0 0.0
  %1164 = vmatpush2.msra.mxu0 0.0
  %1165 = vmatprep.subr.mxu0 0.0
  %1166 = vmatpush2.msra.mxu0 0.0
  %1167 = vmatprep.subr.mxu0 0.0
  %1168 = vmatpush2.msra.mxu0 0.0
  %1169 = vmatprep.subr.mxu0 0.0
  %1170 = vmatpush2.msra.mxu0 0.0
  %1171 = vmatprep.subr.mxu0 0.0
  %1172 = vmatpush2.msra.mxu0 0.0
  %1173 = vmatprep.subr.mxu0 0.0
  %1174 = vmatpush2.msra.mxu0 0.0
  %1175 = vmatprep.subr.mxu0 0.0
  %1176 = vmatpush2.msra.mxu0 0.0
  %1177 = vmatprep.subr.mxu0 0.0
  %1178 = vmatpush2.msra.mxu0 0.0
  %1179 = vmatprep.subr.mxu0 0.0
  %1180 = vmatpush2.msra.mxu0 0.0
  %1181 = vmatprep.subr.mxu0 0.0
  %1182 = vmatpush2.msra.mxu0 0.0
  %1183 = vmatprep.subr.mxu0 0.0
  %1184 = vmatpush2.msra.mxu0 0.0
  %1185 = vmatprep.subr.mxu0 0.0
  %1186 = vmatpush2.msra.mxu0 0.0
  %1187 = vmatprep.mubr.f32.mxu0 0.0
  %1188 = vmatmul.mubr.f32.gmra.mxu0 %v1121
  %v1189 = vpop.f32.mrf.mxu0
  %v1190 = vadd.f32 0.0, %v1189
  %v1191 = vpop.f32.mrf.mxu0
  %1192 = vdwg.mxu0
  %1194 = vrot.lane.b32.xlu0 %v1190, 48
  %v1195 = vpop.permute.xlu0 %1194
  %v1197 = vadd.f32 %v549, %v1195
  %1199 = vrot.lane.b32.xlu0 %v1197, 80
  %v1200 = vpop.permute.xlu0 %1199
  %v1202 = vsel %vm48, %v1200, 0.0
  %1203 = vadd.xlane.f32.xlu0 %v1202
  %v1204 = vpop.xlane.xlu0 %1203
  %v1205 = vrcp.pop 16.0
  %v1206 = vmul.f32 %v1204, %v1205
  %v1207 = vsub.f32 %v1197, %v1206
  %v1208 = vmul.f32 %v1207, %v1207
  %1210 = vrot.lane.b32.xlu0 %v1208, 80
  %v1211 = vpop.permute.xlu0 %1210
  %v1213 = vsel %vm48, %v1211, 0.0
  %1214 = vadd.xlane.f32.xlu0 %v1213
  %v1215 = vpop.xlane.xlu0 %1214
  %v1216 = vmul.f32 %v1215, %v1205
  %v1217 = vadd.f32 %v1216, 1e-06
  %v1218 = vrsqrt.pop %v1217
  %v1219 = vmul.f32 %v1207, %v1218
  %v1220 = vlaneseq
  %v1221 = vshrl.u32 %v1220, 7
  %v1222 = vsub.s32 0, %v1221
  %v1223 = vrot.slane %v32, %v1222
  %1225 = vrot.lane.b32.xlu0 %v1223, 48
  %v1226 = vpop.permute.xlu0 %1225
  %v1228 = vmul.f32 %v1219, %v1226
  %v1229 = vlaneseq
  %v1230 = vshrl.u32 %v1229, 7
  %v1231 = vsub.s32 0, %v1230
  %v1232 = vrot.slane %v33, %v1231
  %1234 = vrot.lane.b32.xlu0 %v1232, 48
  %v1235 = vpop.permute.xlu0 %1234
  %v1237 = vadd.f32 %v1228, %v1235
  %v1238 = vlaneseq
  %v1239 = vshrl.u32 %v1238, 7
  %v1240 = vsub.s32 0, %v1239
  %v1241 = vrot.slane %v36, %v1240
  %1243 = vrot.lane.b32.xlu0 %v1237, 80
  %v1244 = vpop.permute.xlu0 %1243
  %v1245 = vsel %vm48, %v1244, 0
  %1247 = vmatprep.subr.mxu0 0.0
  %1248 = vmatpush1.msra.mxu0 0.0
  %1249 = vmatprep.subr.mxu0 0.0
  %1250 = vmatpush1.msra.mxu0 0.0
  %1251 = vmatprep.subr.mxu0 0.0
  %1252 = vmatpush1.msra.mxu0 0.0
  %1253 = vmatprep.subr.mxu0 0.0
  %1254 = vmatpush1.msra.mxu0 0.0
  %1255 = vmatprep.subr.mxu0 0.0
  %1256 = vmatpush1.msra.mxu0 0.0
  %1257 = vmatprep.subr.mxu0 0.0
  %1258 = vmatpush1.msra.mxu0 0.0
  %1259 = vmatprep.subr.mxu0 0.0
  %1260 = vmatpush1.msra.mxu0 0.0
  %1261 = vmatprep.subr.mxu0 0.0
  %1262 = vmatpush1.msra.mxu0 0.0
  %1263 = vmatprep.subr.mxu0 0.0
  %1264 = vmatpush1.msra.mxu0 0.0
  %1265 = vmatprep.subr.mxu0 0.0
  %1266 = vmatpush1.msra.mxu0 0.0
  %1267 = vmatprep.subr.mxu0 0.0
  %1268 = vmatpush1.msra.mxu0 0.0
  %1269 = vmatprep.subr.mxu0 0.0
  %1270 = vmatpush1.msra.mxu0 0.0
  %1271 = vmatprep.subr.mxu0 0.0
  %1272 = vmatpush1.msra.mxu0 0.0
  %1273 = vmatprep.subr.mxu0 0.0
  %1274 = vmatpush1.msra.mxu0 0.0
  %1275 = vmatprep.subr.mxu0 0.0
  %1276 = vmatpush1.msra.mxu0 %v35
  %1277 = vmatprep.subr.mxu0 0.0
  %1278 = vmatpush1.msra.mxu0 %v34
  %1279 = vmatprep.subr.mxu0 0.0
  %1280 = vmatpush2.msra.mxu0 0.0
  %1281 = vmatprep.subr.mxu0 0.0
  %1282 = vmatpush2.msra.mxu0 0.0
  %1283 = vmatprep.subr.mxu0 0.0
  %1284 = vmatpush2.msra.mxu0 0.0
  %1285 = vmatprep.subr.mxu0 0.0
  %1286 = vmatpush2.msra.mxu0 0.0
  %1287 = vmatprep.subr.mxu0 0.0
  %1288 = vmatpush2.msra.mxu0 0.0
  %1289 = vmatprep.subr.mxu0 0.0
  %1290 = vmatpush2.msra.mxu0 0.0
  %1291 = vmatprep.subr.mxu0 0.0
  %1292 = vmatpush2.msra.mxu0 0.0
  %1293 = vmatprep.subr.mxu0 0.0
  %1294 = vmatpush2.msra.mxu0 0.0
  %1295 = vmatprep.subr.mxu0 0.0
  %1296 = vmatpush2.msra.mxu0 0.0
  %1297 = vmatprep.subr.mxu0 0.0
  %1298 = vmatpush2.msra.mxu0 0.0
  %1299 = vmatprep.subr.mxu0 0.0
  %1300 = vmatpush2.msra.mxu0 0.0
  %1301 = vmatprep.subr.mxu0 0.0
  %1302 = vmatpush2.msra.mxu0 0.0
  %1303 = vmatprep.subr.mxu0 0.0
  %1304 = vmatpush2.msra.mxu0 0.0
  %1305 = vmatprep.subr.mxu0 0.0
  %1306 = vmatpush2.msra.mxu0 0.0
  %1307 = vmatprep.subr.mxu0 0.0
  %1308 = vmatpush2.msra.mxu0 0.0
  %1309 = vmatprep.subr.mxu0 0.0
  %1310 = vmatpush2.msra.mxu0 0.0
  %1311 = vmatprep.mubr.f32.mxu0 0.0
  %1312 = vmatmul.mubr.f32.gmra.mxu0 %v1245
  %v1313 = vpop.f32.mrf.mxu0
  %v1314 = vadd.f32 %v1241, %v1313
  %v1315 = vpop.f32.mrf.mxu0
  %1316 = vdwg.mxu0
  %v1317 = vmax.f32 %v1314, 0.0
  %v1318 = vlaneseq
  %v1319 = vshrl.u32 %v1318, 7
  %v1320 = vsub.s32 0, %v1319
  %v1321 = vrot.slane %v41, %v1320
  %vm1322 = vcmask 261120
  %v1324 = vsel %vm1322, %v1317, 0
  %1326 = vmatprep.subr.mxu0 0.0
  %1327 = vmatpush1.msra.mxu0 0.0
  %1328 = vmatprep.subr.mxu0 0.0
  %1329 = vmatpush1.msra.mxu0 0.0
  %1330 = vmatprep.subr.mxu0 0.0
  %1331 = vmatpush1.msra.mxu0 0.0
  %1332 = vmatprep.subr.mxu0 0.0
  %1333 = vmatpush1.msra.mxu0 0.0
  %1334 = vmatprep.subr.mxu0 0.0
  %1335 = vmatpush1.msra.mxu0 0.0
  %1336 = vmatprep.subr.mxu0 0.0
  %1337 = vmatpush1.msra.mxu0 0.0
  %1338 = vmatprep.subr.mxu0 0.0
  %1339 = vmatpush1.msra.mxu0 0.0
  %1340 = vmatprep.subr.mxu0 0.0
  %1341 = vmatpush1.msra.mxu0 0.0
  %1342 = vmatprep.subr.mxu0 0.0
  %1343 = vmatpush1.msra.mxu0 0.0
  %1344 = vmatprep.subr.mxu0 0.0
  %1345 = vmatpush1.msra.mxu0 0.0
  %1346 = vmatprep.subr.mxu0 0.0
  %1347 = vmatpush1.msra.mxu0 0.0
  %1348 = vmatprep.subr.mxu0 0.0
  %1349 = vmatpush1.msra.mxu0 0.0
  %1350 = vmatprep.subr.mxu0 0.0
  %1351 = vmatpush1.msra.mxu0 %v40
  %1352 = vmatprep.subr.mxu0 0.0
  %1353 = vmatpush1.msra.mxu0 %v39
  %1354 = vmatprep.subr.mxu0 0.0
  %1355 = vmatpush1.msra.mxu0 %v38
  %1356 = vmatprep.subr.mxu0 0.0
  %1357 = vmatpush1.msra.mxu0 %v37
  %1358 = vmatprep.subr.mxu0 0.0
  %1359 = vmatpush2.msra.mxu0 0.0
  %1360 = vmatprep.subr.mxu0 0.0
  %1361 = vmatpush2.msra.mxu0 0.0
  %1362 = vmatprep.subr.mxu0 0.0
  %1363 = vmatpush2.msra.mxu0 0.0
  %1364 = vmatprep.subr.mxu0 0.0
  %1365 = vmatpush2.msra.mxu0 0.0
  %1366 = vmatprep.subr.mxu0 0.0
  %1367 = vmatpush2.msra.mxu0 0.0
  %1368 = vmatprep.subr.mxu0 0.0
  %1369 = vmatpush2.msra.mxu0 0.0
  %1370 = vmatprep.subr.mxu0 0.0
  %1371 = vmatpush2.msra.mxu0 0.0
  %1372 = vmatprep.subr.mxu0 0.0
  %1373 = vmatpush2.msra.mxu0 0.0
  %1374 = vmatprep.subr.mxu0 0.0
  %1375 = vmatpush2.msra.mxu0 0.0
  %1376 = vmatprep.subr.mxu0 0.0
  %1377 = vmatpush2.msra.mxu0 0.0
  %1378 = vmatprep.subr.mxu0 0.0
  %1379 = vmatpush2.msra.mxu0 0.0
  %1380 = vmatprep.subr.mxu0 0.0
  %1381 = vmatpush2.msra.mxu0 0.0
  %1382 = vmatprep.subr.mxu0 0.0
  %1383 = vmatpush2.msra.mxu0 0.0
  %1384 = vmatprep.subr.mxu0 0.0
  %1385 = vmatpush2.msra.mxu0 0.0
  %1386 = vmatprep.subr.mxu0 0.0
  %1387 = vmatpush2.msra.mxu0 0.0
  %1388 = vmatprep.subr.mxu0 0.0
  %1389 = vmatpush2.msra.mxu0 0.0
  %1390 = vmatprep.mubr.f32.mxu0 0.0
  %1391 = vmatmul.mubr.f32.gmra.mxu0 %v1324
  %v1392 = vpop.f32.mrf.mxu0
  %v1393 = vadd.f32 %v1321, %v1392
  %v1394 = vpop.f32.mrf.mxu0
  %1395 = vdwg.mxu0
  %v1397 = vadd.f32 %v1393, %v1244
  %v1398 = vsel %vm48, %v1397, 0.0
  %1399 = vadd.xlane.f32.xlu0 %v1398
  %v1400 = vpop.xlane.xlu0 %1399
  %v1401 = vmul.f32 %v1400, %v1205
  %v1402 = vsub.f32 %v1397, %v1401
  %v1403 = vmul.f32 %v1402, %v1402
  %v1404 = vsel %vm48, %v1403, 0.0
  %1405 = vadd.xlane.f32.xlu0 %v1404
  %v1406 = vpop.xlane.xlu0 %1405
  %v1407 = vmul.f32 %v1406, %v1205
  %v1408 = vadd.f32 %v1407, 1e-06
  %v1409 = vrsqrt.pop %v1408
  %v1410 = vmul.f32 %v1402, %v1409
  %v1411 = vlaneseq
  %v1412 = vshrl.u32 %v1411, 7
  %v1413 = vsub.s32 0, %v1412
  %v1414 = vrot.slane %v42, %v1413
  %v1415 = vmul.f32 %v1410, %v1414
  %v1416 = vlaneseq
  %v1417 = vshrl.u32 %v1416, 7
  %v1418 = vsub.s32 0, %v1417
  %v1419 = vrot.slane %v43, %v1418
  %v1420 = vadd.f32 %v1415, %v1419
  %v1421 = vsel %vm861, %v872, 0.0
  %v1422 = vsel %vm861, %v1033, 0.0
  %v1424 = vrot.slane %v543, 6
  %1425 = vrot.lane.b32.xlu0 %v1424, 80
  %v1426 = vpop.permute.xlu0 %1425
  %v1429 = vrot.slane %v537, 4
  %1430 = vrot.lane.b32.xlu0 %v1429, 112
  %v1431 = vpop.permute.xlu0 %1430
  %v1434 = vrot.slane %v1421, 4
  %v1437 = vrot.slane %v1422, 4
  %v1439 = vsel %vm544, %v1426, %v1431
  %v1440 = vsel %vm546, %v1439, %v1434
  %v1441 = vsel %vm546, %v1434, %v1437
  %1442 = vst.msk [vmem:[%s2] sm:$0xff] %vm48, %v1420
  %1443 = vst.msk [vmem:[%s2 + $0x8] sm:$0xff] %vm48, %v1440
  %1444 = vst.msk [vmem:[%s2 + $0x10] sm:$0xff] %vm48, %v1441
  %vm1445 = vcmask 125952
  %1446 = vst.msk [vmem:[%s2 + $0x18] sm:$0xf] %vm1445, %v1437
  // Predicated region
  $region10: #{decoder_layer_forward.1} parent=0 // pred_check
    _
  $region11: #{decoder_layer_forward.1} parent=0 // pred_check_branch
    %1448 = sbr.rel (0) target = $region13
  $region12: #{decoder_layer_forward.1} parent=0 // pred_region
    _
  $region13: #{decoder_layer_forward.1} parent=0 // pred_fallthru
    _
  // Predicated region
  $region14: #{decoder_layer_forward.1} parent=0 // pred_check
    _
  $region15: #{decoder_layer_forward.1} parent=0 // pred_check_branch
    %1450 = sbr.rel (0) target = $region17
  $region16: #{decoder_layer_forward.1} parent=0 // pred_region
    _
  $region17: #{decoder_layer_forward.1} parent=0 // pred_fallthru
    _

</llo_original>
